<compile_context>
chip_gen: v7x
topology: tpu7x:2x2x1
jax: 0.10.0
libtpu: 0.0.40
codegen_flags: <defaults>
</compile_context>

<pallas_src>
import functools

import jax
import jax.numpy as jnp
from jax import lax
from jax.experimental import pallas as pl
from jax.experimental.pallas import tpu as pltpu


def _round_up(x, m):
    return ((x + m - 1) // m) * m


def _sigmoid(z):
    # sigmoid(z) == 0.5 * (1 + tanh(z / 2)): a single EUP push per gate.
    return 0.5 * (jnp.tanh(0.5 * z) + 1.0)


def _lstm_chunk_kernel(x_ref, wih_ref, whh_ref, bias_ref, h0_ref, c0_ref,
                       out_ref, h_scr, c_scr, gx_scr, *, unroll):
    """One (batch-tile, seq-chunk) grid cell of the LSTM recurrence.

    x_ref   : (TS, BT, D)        time-major input chunk (f32 or bf16)
    wih_ref : (D,  4*Hp)         W_ih^T, gate-major, each gate zero-padded to Hp
    whh_ref : (Hp, 4*Hp)         W_hh^T, padded likewise (resident across grid)
    bias_ref: (1,  4*Hp) f32     b_ih + b_hh (zero in padded lanes)
    h0_ref  : (BT, Hp) f32       initial hidden state for this batch tile
    c0_ref  : (BT, Hp) f32       initial cell state for this batch tile
    out_ref : (TS, BT, Hp)       h_t for every timestep of the chunk
    h_scr/c_scr : (BT, Hp) f32   VMEM scratch, carried across seq chunks
    gx_scr  : (TS, BT, 4*Hp) f32 per-chunk input-projection slab (VMEM only)
    """
    s = pl.program_id(1)              # seq-chunk index ("arbitrary" axis)
    TS, BT, D = x_ref.shape
    Hp = whh_ref.shape[0]

    @pl.when(s == 0)
    def _():
        h_scr[...] = h0_ref[...]
        c_scr[...] = c0_ref[...]

    # Fused input projection for the whole chunk: one MXU matmul instead of TS
    # small ones on the serial chain, and no HBM round-trip of a 4*Hp-wide slab.
    xc = x_ref[...].astype(wih_ref.dtype).reshape(TS * BT, D)
    gx = jnp.dot(xc, wih_ref[...], preferred_element_type=jnp.float32)
    gx_scr[...] = (gx + bias_ref[...]).reshape(TS, BT, 4 * Hp)

    def step(t, carry):
        h = h_scr[...]
        c = c_scr[...]
        # Only the recurrent matmul + gate nonlinearities sit on the serial
        # per-step critical path (bf16 operands when rec_dtype=bf16).
        gates = gx_scr[t] + jnp.dot(h.astype(whh_ref.dtype), whh_ref[...],
                                    preferred_element_type=jnp.float32)

        # Hp % 128 == 0 -> gate slices are 128-lane aligned (free vreg selects).
        i_g = _sigmoid(gates[:, 0 * Hp:1 * Hp])
        f_g = _sigmoid(gates[:, 1 * Hp:2 * Hp])
        g_g = jnp.tanh(gates[:, 2 * Hp:3 * Hp])
        o_g = _sigmoid(gates[:, 3 * Hp:4 * Hp])

        c_new = f_g * c + i_g * g_g
        h_new = o_g * jnp.tanh(c_new)

        h_scr[...] = h_new
        c_scr[...] = c_new
        out_ref[t] = h_new.astype(out_ref.dtype)   # full (8,128) tiles, unmasked
        return carry

    # Bounded unroll: LLO scheduling visibility without code-size blow-up.
    lax.fori_loop(0, TS, step, 0, unroll=unroll)


def lstm_forward(x_bsd, w_ih, w_hh, b_ih, b_hh, h0, c0, *,
                 seq_chunk=None, batch_tile=8, rec_dtype=jnp.float32):
    """x_bsd: (batch, seq, input). Returns (batch, seq, hidden).

    rec_dtype: dtype of the MXU operands (weights, x, h). jnp.bfloat16 is
    recommended on v6e/v7x (f32 accumulation is kept either way); the f32
    default keeps the tight-tolerance check against the f32 reference exact.
    """
    B, S, D = x_bsd.shape
    H = w_hh.shape[1]

    Hp = _round_up(H, 128)            # lane-aligned gates + lane-dense stores
    Bp = _round_up(max(B, 8), 8)      # full sublane groups
    BT = min(batch_tile, Bp)
    assert BT % 8 == 0 and Bp % BT == 0

    if seq_chunk is None:
        # Keep the per-chunk working set (gate scratch + double-buffered x/out
        # blocks) at a few MiB; well within 64 MiB VMEM on v7x.
        seq_chunk = max(1, (4 << 20) // (BT * 4 * Hp * 4))
    TS = max(1, min(seq_chunk, S))
    Sp = _round_up(S, TS)

    # ---- gate-major, per-gate-padded weight layout --------------------------
    def gate_major_T(w, in_dim):
        # (4H, in) PyTorch [i;f;g;o] rows -> (in, 4*Hp), transposed, gate-major,
        # each gate zero-padded H -> Hp.
        w4 = w.reshape(4, H, in_dim)
        w4 = jnp.transpose(w4, (2, 0, 1))                       # (in, 4, H)
        w4 = jnp.pad(w4, ((0, 0), (0, 0), (0, Hp - H)))
        return w4.reshape(in_dim, 4 * Hp)

    wih_p = gate_major_T(w_ih.astype(jnp.float32), D).astype(rec_dtype)  # (D, 4Hp)
    whh_p = gate_major_T(w_hh.astype(jnp.float32), H)                    # (H, 4Hp)
    whh_p = jnp.pad(whh_p, ((0, Hp - H), (0, 0))).astype(rec_dtype)      # (Hp, 4Hp)

    bias = (b_ih + b_hh).astype(jnp.float32).reshape(4, H)
    bias = jnp.pad(bias, ((0, 0), (0, Hp - H))).reshape(1, 4 * Hp)

    h0_p = jnp.pad(h0.astype(jnp.float32), ((0, Bp - B), (0, Hp - H)))
    c0_p = jnp.pad(c0.astype(jnp.float32), ((0, Bp - B), (0, Hp - H)))

    # Time-major x (Sp, Bp, D): one HBM pass over the (narrow, D-wide) input;
    # replaces writing + reading the 4*Hp-wide gx slab of the unfused design.
    x_p = jnp.pad(x_bsd.astype(rec_dtype), ((0, Bp - B), (0, Sp - S), (0, 0)))
    x_tm = jnp.transpose(x_p, (1, 0, 2))

    nb, ns = Bp // BT, Sp // TS
    kernel = functools.partial(_lstm_chunk_kernel, unroll=min(8, TS))

    out_tm = pl.pallas_call(
        kernel,
        out_shape=jax.ShapeDtypeStruct((Sp, Bp, Hp), jnp.float32),
        grid=(nb, ns),
        in_specs=[
            pl.BlockSpec((TS, BT, D), lambda b, s: (s, b, 0)),     # x chunk (pipelined)
            pl.BlockSpec((D, 4 * Hp), lambda b, s: (0, 0)),        # W_ih^T (fetched once)
            pl.BlockSpec((Hp, 4 * Hp), lambda b, s: (0, 0)),       # W_hh^T (fetched once)
            pl.BlockSpec((1, 4 * Hp), lambda b, s: (0, 0)),        # bias
            pl.BlockSpec((BT, Hp), lambda b, s: (b, 0)),           # h0 (per batch tile)
            pl.BlockSpec((BT, Hp), lambda b, s: (b, 0)),           # c0 (per batch tile)
        ],
        out_specs=pl.BlockSpec((TS, BT, Hp), lambda b, s: (s, b, 0)),
        scratch_shapes=[
            pltpu.VMEM((BT, Hp), jnp.float32),           # h carry (across seq chunks)
            pltpu.VMEM((BT, Hp), jnp.float32),           # c carry
            pltpu.VMEM((TS, BT, 4 * Hp), jnp.float32),   # per-chunk gate pre-activations
        ],
        compiler_params=pltpu.CompilerParams(
            # batch tiles independent -> megacore-shardable; seq chunks serial.
            dimension_semantics=("parallel", "arbitrary"),
            # v5e's default scoped VMEM is only 16 MiB (32 MiB on v6e/v7x);
            # 48 MiB is safe on every generation (v7x physical = 64 MiB/TC).
            vmem_limit_bytes=48 * 1024 * 1024,
        ),
    )(x_tm, wih_p, whh_p, bias, h0_p, c0_p)

    # (Sp, Bp, Hp) time-major -> (B, S, H) batch-major (module semantics).
    # TODO(synk): return time-major directly (skipping this HBM pass) if the
    #             downstream consumer accepts (seq, batch, hidden).
    return jnp.transpose(out_tm, (1, 0, 2))[:B, :S, :H]


def lstm_reference(x_bsd, w_ih, w_hh, b_ih, b_hh, h0, c0):
    """Pure-JAX reference implementing PyTorch nn.LSTM semantics."""
    H = w_hh.shape[1]
    x_sbd = jnp.transpose(x_bsd, (1, 0, 2))

    def step(carry, x_t):
        h, c = carry
        gates = x_t @ w_ih.T + h @ w_hh.T + b_ih + b_hh
        i = jax.nn.sigmoid(gates[:, 0 * H:1 * H])
        f = jax.nn.sigmoid(gates[:, 1 * H:2 * H])
        g = jnp.tanh(gates[:, 2 * H:3 * H])
        o = jax.nn.sigmoid(gates[:, 3 * H:4 * H])
        c_new = f * c + i * g
        h_new = o * jnp.tanh(c_new)
        return (h_new, c_new), h_new

    _, out = jax.lax.scan(step, (h0, c0), x_sbd)
    return jnp.transpose(out, (1, 0, 2))


if __name__ == "__main__":
    # Small deterministic config consistent with the module's forward.
    # batch=12 -> 2 batch tiles (exercises the "parallel" axis), seq=10 with
    # seq_chunk=4 -> 3 seq chunks incl. padding (exercises the scratch carry).
    batch, seq, input_size, hidden = 12, 10, 10, 32

    key = jax.random.PRNGKey(0)
    k1, k2, k3, k4, k5, k6, k7 = jax.random.split(key, 7)

    # PyTorch-style uniform(-1/sqrt(H), 1/sqrt(H)) init for LSTM parameters.
    bound = 1.0 / jnp.sqrt(jnp.float32(hidden))
    w_ih = jax.random.uniform(k1, (4 * hidden, input_size), jnp.float32, -bound, bound)
    w_hh = jax.random.uniform(k2, (4 * hidden, hidden), jnp.float32, -bound, bound)
    b_ih = jax.random.uniform(k3, (4 * hidden,), jnp.float32, -bound, bound)
    b_hh = jax.random.uniform(k4, (4 * hidden,), jnp.float32, -bound, bound)

    # hidden_cell (h0, c0) is assigned externally before forward(); use small
    # random values so the per-batch-tile state blocking is actually exercised.
    h0 = 0.1 * jax.random.normal(k5, (batch, hidden), jnp.float32)
    c0 = 0.1 * jax.random.normal(k6, (batch, hidden), jnp.float32)
    x = jax.random.normal(k7, (batch, seq, input_size), jnp.float32)

    ref = lstm_reference(x, w_ih, w_hh, b_ih, b_hh, h0, c0)

    # Exact-precision path (f32 MXU operands): tight tolerance vs. f32 reference.
    out = lstm_forward(x, w_ih, w_hh, b_ih, b_hh, h0, c0, seq_chunk=4)
    out = jax.block_until_ready(out)
    assert out.shape == (batch, seq, hidden)
    assert jnp.allclose(out, ref, atol=1e-5, rtol=1e-5), "f32 path mismatch vs reference"

    # bf16 MXU-operand path (f32 accumulation), as recommended for v6e/v7x.
    # Looser tolerance: low-precision error accumulates over the recurrence.
    out_bf16 = lstm_forward(x, w_ih, w_hh, b_ih, b_hh, h0, c0,
                            seq_chunk=4, rec_dtype=jnp.bfloat16)
    out_bf16 = jax.block_until_ready(out_bf16)
    assert out_bf16.shape == (batch, seq, hidden)
    assert jnp.allclose(out_bf16, ref, atol=5e-2, rtol=5e-2), "bf16 path mismatch vs reference"

    print("KERNEL_OK")
</pallas_src>

<mosaic_0001>
module attributes {stable_mosaic.version = 11 : i64} {
  func.func @_lstm_chunk_kernel(%arg0: i32, %arg1: i32, %arg2: memref<4x8x10xf32, #tpu.memory_space<vmem>>, %arg3: memref<10x512xf32, #tpu.memory_space<vmem>>, %arg4: memref<128x512xf32, #tpu.memory_space<vmem>>, %arg5: memref<1x512xf32, #tpu.memory_space<vmem>>, %arg6: memref<8x128xf32, #tpu.memory_space<vmem>>, %arg7: memref<8x128xf32, #tpu.memory_space<vmem>>, %arg8: memref<4x8x128xf32, #tpu.memory_space<vmem>>, %arg9: memref<8x128xf32, #tpu.memory_space<vmem>>, %arg10: memref<8x128xf32, #tpu.memory_space<vmem>>, %arg11: memref<4x8x512xf32, #tpu.memory_space<vmem>>) attributes {dimension_semantics = [#tpu.dimension_semantics<parallel>, #tpu.dimension_semantics<arbitrary>], iteration_bounds = array<i64: 2, 3>, scalar_prefetch = 0 : i64, scratch_operands = 3 : i64, tpu.core_type = #tpu.core_type<tc>, window_params = [{transform_indices = @transform_0, window_bounds = array<i64: 4, 8, 10>}, {pipeline_mode = #tpu.pipeline_mode<synchronous>, transform_indices = @transform_1, window_bounds = array<i64: 10, 512>}, {pipeline_mode = #tpu.pipeline_mode<synchronous>, transform_indices = @transform_2, window_bounds = array<i64: 128, 512>}, {pipeline_mode = #tpu.pipeline_mode<synchronous>, transform_indices = @transform_3, window_bounds = array<i64: 1, 512>}, {transform_indices = @transform_4, window_bounds = array<i64: 8, 128>}, {transform_indices = @transform_5, window_bounds = array<i64: 8, 128>}, {transform_indices = @transform_6, window_bounds = array<i64: 4, 8, 128>}]} {
    %c0_i32 = arith.constant 0 : i32
    %0 = arith.cmpi eq, %arg1, %c0_i32 : i32
    %1 = arith.extui %0 : i1 to i32
    %c0_i32_0 = arith.constant 0 : i32
    %2 = arith.cmpi ne, %1, %c0_i32_0 : i32
    scf.if %2 {
      %c0_107 = arith.constant 0 : index
      %c0_108 = arith.constant 0 : index
      %192 = vector.load %arg6[%c0_107, %c0_108] : memref<8x128xf32, #tpu.memory_space<vmem>>, vector<8x128xf32>
      %c0_109 = arith.constant 0 : index
      %c0_110 = arith.constant 0 : index
      %193 = vector.load %arg9[%c0_109, %c0_110] : memref<8x128xf32, #tpu.memory_space<vmem>>, vector<8x128xf32>
      tpu.vector_store %arg9[%c0_109, %c0_110], %192 {strides = array<i32>} : memref<8x128xf32, #tpu.memory_space<vmem>>, vector<8x128xf32>,
      %c0_111 = arith.constant 0 : index
      %c0_112 = arith.constant 0 : index
      %194 = vector.load %arg7[%c0_111, %c0_112] : memref<8x128xf32, #tpu.memory_space<vmem>>, vector<8x128xf32>
      %c0_113 = arith.constant 0 : index
      %c0_114 = arith.constant 0 : index
      %195 = vector.load %arg10[%c0_113, %c0_114] : memref<8x128xf32, #tpu.memory_space<vmem>>, vector<8x128xf32>
      tpu.vector_store %arg10[%c0_113, %c0_114], %194 {strides = array<i32>} : memref<8x128xf32, #tpu.memory_space<vmem>>, vector<8x128xf32>,
    } else {
    }
    %c0 = arith.constant 0 : index
    %c0_1 = arith.constant 0 : index
    %c0_2 = arith.constant 0 : index
    %3 = vector.load %arg2[%c0, %c0_1, %c0_2] : memref<4x8x10xf32, #tpu.memory_space<vmem>>, vector<4x8x10xf32>
    %4 = vector.shape_cast %3 : vector<4x8x10xf32> to vector<32x10xf32>
    %c0_3 = arith.constant 0 : index
    %c0_4 = arith.constant 0 : index
    %5 = vector.load %arg3[%c0_3, %c0_4] : memref<10x512xf32, #tpu.memory_space<vmem>>, vector<10x512xf32>
    %cst = arith.constant dense<0.000000e+00> : vector<32x512xf32>
    %6 = tpu.matmul %4, %5, %cst {dimension_numbers = #tpu.dot_dimension_numbers<[1], [0], [0], [1], [0, 0, 1, 1], [], []>} : vector<32x10xf32>, vector<10x512xf32>, vector<32x512xf32> -> vector<32x512xf32>
    %c0_5 = arith.constant 0 : index
    %c0_6 = arith.constant 0 : index
    %7 = vector.load %arg5[%c0_5, %c0_6] : memref<1x512xf32, #tpu.memory_space<vmem>>, vector<1x512xf32>
    %8 = vector.broadcast %7 : vector<1x512xf32> to vector<32x512xf32>
    %9 = arith.addf %6, %8 : vector<32x512xf32>
    %10 = vector.shape_cast %9 : vector<32x512xf32> to vector<4x8x512xf32>
    %c0_7 = arith.constant 0 : index
    %c0_8 = arith.constant 0 : index
    %c0_9 = arith.constant 0 : index
    %11 = vector.load %arg11[%c0_7, %c0_8, %c0_9] : memref<4x8x512xf32, #tpu.memory_space<vmem>>, vector<4x8x512xf32>
    tpu.vector_store %arg11[%c0_7, %c0_8, %c0_9], %10 {strides = array<i32>} : memref<4x8x512xf32, #tpu.memory_space<vmem>>, vector<4x8x512xf32>,
    %c0_i32_10 = arith.constant 0 : i32
    %c0_11 = arith.constant 0 : index
    %c0_12 = arith.constant 0 : index
    %12 = vector.load %arg9[%c0_11, %c0_12] : memref<8x128xf32, #tpu.memory_space<vmem>>, vector<8x128xf32>
    %c0_13 = arith.constant 0 : index
    %c0_14 = arith.constant 0 : index
    %13 = vector.load %arg10[%c0_13, %c0_14] : memref<8x128xf32, #tpu.memory_space<vmem>>, vector<8x128xf32>
    %14 = arith.index_cast %c0_i32_10 : i32 to index
    %c0_15 = arith.constant 0 : index
    %c0_16 = arith.constant 0 : index
    %15 = vector.load %arg11[%14, %c0_15, %c0_16] : memref<4x8x512xf32, #tpu.memory_space<vmem>>, vector<1x8x512xf32>
    %16 = vector.shape_cast %15 : vector<1x8x512xf32> to vector<8x512xf32>
    %c0_17 = arith.constant 0 : index
    %c0_18 = arith.constant 0 : index
    %17 = vector.load %arg4[%c0_17, %c0_18] : memref<128x512xf32, #tpu.memory_space<vmem>>, vector<128x512xf32>
    %cst_19 = arith.constant dense<0.000000e+00> : vector<8x512xf32>
    %18 = tpu.matmul %12, %17, %cst_19 {dimension_numbers = #tpu.dot_dimension_numbers<[1], [0], [0], [1], [0, 0, 1, 1], [], []>} : vector<8x128xf32>, vector<128x512xf32>, vector<8x512xf32> -> vector<8x512xf32>
    %19 = arith.addf %16, %18 : vector<8x512xf32>
    %20 = vector.extract_strided_slice %19 {offsets = [0, 0], sizes = [8, 128], strides = [1, 1]} : vector<8x512xf32> to vector<8x128xf32>
    %cst_20 = arith.constant 5.000000e-01 : f32
    %21 = vector.broadcast %cst_20 : f32 to vector<8x128xf32>
    %22 = arith.mulf %21, %20 : vector<8x128xf32>
    %23 = math.tanh %22 : vector<8x128xf32>
    %cst_21 = arith.constant 1.000000e+00 : f32
    %24 = vector.broadcast %cst_21 : f32 to vector<8x128xf32>
    %25 = arith.addf %23, %24 : vector<8x128xf32>
    %cst_22 = arith.constant 5.000000e-01 : f32
    %26 = vector.broadcast %cst_22 : f32 to vector<8x128xf32>
    %27 = arith.mulf %26, %25 : vector<8x128xf32>
    %28 = vector.extract_strided_slice %19 {offsets = [0, 128], sizes = [8, 128], strides = [1, 1]} : vector<8x512xf32> to vector<8x128xf32>
    %cst_23 = arith.constant 5.000000e-01 : f32
    %29 = vector.broadcast %cst_23 : f32 to vector<8x128xf32>
    %30 = arith.mulf %29, %28 : vector<8x128xf32>
    %31 = math.tanh %30 : vector<8x128xf32>
    %cst_24 = arith.constant 1.000000e+00 : f32
    %32 = vector.broadcast %cst_24 : f32 to vector<8x128xf32>
    %33 = arith.addf %31, %32 : vector<8x128xf32>
    %cst_25 = arith.constant 5.000000e-01 : f32
    %34 = vector.broadcast %cst_25 : f32 to vector<8x128xf32>
    %35 = arith.mulf %34, %33 : vector<8x128xf32>
    %36 = vector.extract_strided_slice %19 {offsets = [0, 256], sizes = [8, 128], strides = [1, 1]} : vector<8x512xf32> to vector<8x128xf32>
    %37 = math.tanh %36 : vector<8x128xf32>
    %38 = vector.extract_strided_slice %19 {offsets = [0, 384], sizes = [8, 128], strides = [1, 1]} : vector<8x512xf32> to vector<8x128xf32>
    %cst_26 = arith.constant 5.000000e-01 : f32
    %39 = vector.broadcast %cst_26 : f32 to vector<8x128xf32>
    %40 = arith.mulf %39, %38 : vector<8x128xf32>
    %41 = math.tanh %40 : vector<8x128xf32>
    %cst_27 = arith.constant 1.000000e+00 : f32
    %42 = vector.broadcast %cst_27 : f32 to vector<8x128xf32>
    %43 = arith.addf %41, %42 : vector<8x128xf32>
    %cst_28 = arith.constant 5.000000e-01 : f32
    %44 = vector.broadcast %cst_28 : f32 to vector<8x128xf32>
    %45 = arith.mulf %44, %43 : vector<8x128xf32>
    %46 = arith.mulf %35, %13 : vector<8x128xf32>
    %47 = arith.mulf %27, %37 : vector<8x128xf32>
    %48 = arith.addf %46, %47 : vector<8x128xf32>
    %49 = math.tanh %48 : vector<8x128xf32>
    %50 = arith.mulf %45, %49 : vector<8x128xf32>
    %c0_29 = arith.constant 0 : index
    %c0_30 = arith.constant 0 : index
    %51 = vector.load %arg9[%c0_29, %c0_30] : memref<8x128xf32, #tpu.memory_space<vmem>>, vector<8x128xf32>
    tpu.vector_store %arg9[%c0_29, %c0_30], %50 {strides = array<i32>} : memref<8x128xf32, #tpu.memory_space<vmem>>, vector<8x128xf32>,
    %c0_31 = arith.constant 0 : index
    %c0_32 = arith.constant 0 : index
    %52 = vector.load %arg10[%c0_31, %c0_32] : memref<8x128xf32, #tpu.memory_space<vmem>>, vector<8x128xf32>
    tpu.vector_store %arg10[%c0_31, %c0_32], %48 {strides = array<i32>} : memref<8x128xf32, #tpu.memory_space<vmem>>, vector<8x128xf32>,
    %53 = arith.index_cast %c0_i32_10 : i32 to index
    %c0_33 = arith.constant 0 : index
    %c0_34 = arith.constant 0 : index
    %54 = vector.load %arg8[%53, %c0_33, %c0_34] : memref<4x8x128xf32, #tpu.memory_space<vmem>>, vector<1x8x128xf32>
    %55 = vector.shape_cast %54 : vector<1x8x128xf32> to vector<8x128xf32>
    %56 = vector.shape_cast %50 : vector<8x128xf32> to vector<1x8x128xf32>
    tpu.vector_store %arg8[%53, %c0_33, %c0_34], %56 {strides = array<i32>} : memref<4x8x128xf32, #tpu.memory_space<vmem>>, vector<1x8x128xf32>,
    %c1_i32 = arith.constant 1 : i32
    %c0_35 = arith.constant 0 : index
    %c0_36 = arith.constant 0 : index
    %57 = vector.load %arg9[%c0_35, %c0_36] : memref<8x128xf32, #tpu.memory_space<vmem>>, vector<8x128xf32>
    %c0_37 = arith.constant 0 : index
    %c0_38 = arith.constant 0 : index
    %58 = vector.load %arg10[%c0_37, %c0_38] : memref<8x128xf32, #tpu.memory_space<vmem>>, vector<8x128xf32>
    %59 = arith.index_cast %c1_i32 : i32 to index
    %c0_39 = arith.constant 0 : index
    %c0_40 = arith.constant 0 : index
    %60 = vector.load %arg11[%59, %c0_39, %c0_40] : memref<4x8x512xf32, #tpu.memory_space<vmem>>, vector<1x8x512xf32>
    %61 = vector.shape_cast %60 : vector<1x8x512xf32> to vector<8x512xf32>
    %c0_41 = arith.constant 0 : index
    %c0_42 = arith.constant 0 : index
    %62 = vector.load %arg4[%c0_41, %c0_42] : memref<128x512xf32, #tpu.memory_space<vmem>>, vector<128x512xf32>
    %cst_43 = arith.constant dense<0.000000e+00> : vector<8x512xf32>
    %63 = tpu.matmul %57, %62, %cst_43 {dimension_numbers = #tpu.dot_dimension_numbers<[1], [0], [0], [1], [0, 0, 1, 1], [], []>} : vector<8x128xf32>, vector<128x512xf32>, vector<8x512xf32> -> vector<8x512xf32>
    %64 = arith.addf %61, %63 : vector<8x512xf32>
    %65 = vector.extract_strided_slice %64 {offsets = [0, 0], sizes = [8, 128], strides = [1, 1]} : vector<8x512xf32> to vector<8x128xf32>
    %cst_44 = arith.constant 5.000000e-01 : f32
    %66 = vector.broadcast %cst_44 : f32 to vector<8x128xf32>
    %67 = arith.mulf %66, %65 : vector<8x128xf32>
    %68 = math.tanh %67 : vector<8x128xf32>
    %cst_45 = arith.constant 1.000000e+00 : f32
    %69 = vector.broadcast %cst_45 : f32 to vector<8x128xf32>
    %70 = arith.addf %68, %69 : vector<8x128xf32>
    %cst_46 = arith.constant 5.000000e-01 : f32
    %71 = vector.broadcast %cst_46 : f32 to vector<8x128xf32>
    %72 = arith.mulf %71, %70 : vector<8x128xf32>
    %73 = vector.extract_strided_slice %64 {offsets = [0, 128], sizes = [8, 128], strides = [1, 1]} : vector<8x512xf32> to vector<8x128xf32>
    %cst_47 = arith.constant 5.000000e-01 : f32
    %74 = vector.broadcast %cst_47 : f32 to vector<8x128xf32>
    %75 = arith.mulf %74, %73 : vector<8x128xf32>
    %76 = math.tanh %75 : vector<8x128xf32>
    %cst_48 = arith.constant 1.000000e+00 : f32
    %77 = vector.broadcast %cst_48 : f32 to vector<8x128xf32>
    %78 = arith.addf %76, %77 : vector<8x128xf32>
    %cst_49 = arith.constant 5.000000e-01 : f32
    %79 = vector.broadcast %cst_49 : f32 to vector<8x128xf32>
    %80 = arith.mulf %79, %78 : vector<8x128xf32>
    %81 = vector.extract_strided_slice %64 {offsets = [0, 256], sizes = [8, 128], strides = [1, 1]} : vector<8x512xf32> to vector<8x128xf32>
    %82 = math.tanh %81 : vector<8x128xf32>
    %83 = vector.extract_strided_slice %64 {offsets = [0, 384], sizes = [8, 128], strides = [1, 1]} : vector<8x512xf32> to vector<8x128xf32>
    %cst_50 = arith.constant 5.000000e-01 : f32
    %84 = vector.broadcast %cst_50 : f32 to vector<8x128xf32>
    %85 = arith.mulf %84, %83 : vector<8x128xf32>
    %86 = math.tanh %85 : vector<8x128xf32>
    %cst_51 = arith.constant 1.000000e+00 : f32
    %87 = vector.broadcast %cst_51 : f32 to vector<8x128xf32>
    %88 = arith.addf %86, %87 : vector<8x128xf32>
    %cst_52 = arith.constant 5.000000e-01 : f32
    %89 = vector.broadcast %cst_52 : f32 to vector<8x128xf32>
    %90 = arith.mulf %89, %88 : vector<8x128xf32>
    %91 = arith.mulf %80, %58 : vector<8x128xf32>
    %92 = arith.mulf %72, %82 : vector<8x128xf32>
    %93 = arith.addf %91, %92 : vector<8x128xf32>
    %94 = math.tanh %93 : vector<8x128xf32>
    %95 = arith.mulf %90, %94 : vector<8x128xf32>
    %c0_53 = arith.constant 0 : index
    %c0_54 = arith.constant 0 : index
    %96 = vector.load %arg9[%c0_53, %c0_54] : memref<8x128xf32, #tpu.memory_space<vmem>>, vector<8x128xf32>
    tpu.vector_store %arg9[%c0_53, %c0_54], %95 {strides = array<i32>} : memref<8x128xf32, #tpu.memory_space<vmem>>, vector<8x128xf32>,
    %c0_55 = arith.constant 0 : index
    %c0_56 = arith.constant 0 : index
    %97 = vector.load %arg10[%c0_55, %c0_56] : memref<8x128xf32, #tpu.memory_space<vmem>>, vector<8x128xf32>
    tpu.vector_store %arg10[%c0_55, %c0_56], %93 {strides = array<i32>} : memref<8x128xf32, #tpu.memory_space<vmem>>, vector<8x128xf32>,
    %98 = arith.index_cast %c1_i32 : i32 to index
    %c0_57 = arith.constant 0 : index
    %c0_58 = arith.constant 0 : index
    %99 = vector.load %arg8[%98, %c0_57, %c0_58] : memref<4x8x128xf32, #tpu.memory_space<vmem>>, vector<1x8x128xf32>
    %100 = vector.shape_cast %99 : vector<1x8x128xf32> to vector<8x128xf32>
    %101 = vector.shape_cast %95 : vector<8x128xf32> to vector<1x8x128xf32>
    tpu.vector_store %arg8[%98, %c0_57, %c0_58], %101 {strides = array<i32>} : memref<4x8x128xf32, #tpu.memory_space<vmem>>, vector<1x8x128xf32>,
    %c2_i32 = arith.constant 2 : i32
    %c0_59 = arith.constant 0 : index
    %c0_60 = arith.constant 0 : index
    %102 = vector.load %arg9[%c0_59, %c0_60] : memref<8x128xf32, #tpu.memory_space<vmem>>, vector<8x128xf32>
    %c0_61 = arith.constant 0 : index
    %c0_62 = arith.constant 0 : index
    %103 = vector.load %arg10[%c0_61, %c0_62] : memref<8x128xf32, #tpu.memory_space<vmem>>, vector<8x128xf32>
    %104 = arith.index_cast %c2_i32 : i32 to index
    %c0_63 = arith.constant 0 : index
    %c0_64 = arith.constant 0 : index
    %105 = vector.load %arg11[%104, %c0_63, %c0_64] : memref<4x8x512xf32, #tpu.memory_space<vmem>>, vector<1x8x512xf32>
    %106 = vector.shape_cast %105 : vector<1x8x512xf32> to vector<8x512xf32>
    %c0_65 = arith.constant 0 : index
    %c0_66 = arith.constant 0 : index
    %107 = vector.load %arg4[%c0_65, %c0_66] : memref<128x512xf32, #tpu.memory_space<vmem>>, vector<128x512xf32>
    %cst_67 = arith.constant dense<0.000000e+00> : vector<8x512xf32>
    %108 = tpu.matmul %102, %107, %cst_67 {dimension_numbers = #tpu.dot_dimension_numbers<[1], [0], [0], [1], [0, 0, 1, 1], [], []>} : vector<8x128xf32>, vector<128x512xf32>, vector<8x512xf32> -> vector<8x512xf32>
    %109 = arith.addf %106, %108 : vector<8x512xf32>
    %110 = vector.extract_strided_slice %109 {offsets = [0, 0], sizes = [8, 128], strides = [1, 1]} : vector<8x512xf32> to vector<8x128xf32>
    %cst_68 = arith.constant 5.000000e-01 : f32
    %111 = vector.broadcast %cst_68 : f32 to vector<8x128xf32>
    %112 = arith.mulf %111, %110 : vector<8x128xf32>
    %113 = math.tanh %112 : vector<8x128xf32>
    %cst_69 = arith.constant 1.000000e+00 : f32
    %114 = vector.broadcast %cst_69 : f32 to vector<8x128xf32>
    %115 = arith.addf %113, %114 : vector<8x128xf32>
    %cst_70 = arith.constant 5.000000e-01 : f32
    %116 = vector.broadcast %cst_70 : f32 to vector<8x128xf32>
    %117 = arith.mulf %116, %115 : vector<8x128xf32>
    %118 = vector.extract_strided_slice %109 {offsets = [0, 128], sizes = [8, 128], strides = [1, 1]} : vector<8x512xf32> to vector<8x128xf32>
    %cst_71 = arith.constant 5.000000e-01 : f32
    %119 = vector.broadcast %cst_71 : f32 to vector<8x128xf32>
    %120 = arith.mulf %119, %118 : vector<8x128xf32>
    %121 = math.tanh %120 : vector<8x128xf32>
    %cst_72 = arith.constant 1.000000e+00 : f32
    %122 = vector.broadcast %cst_72 : f32 to vector<8x128xf32>
    %123 = arith.addf %121, %122 : vector<8x128xf32>
    %cst_73 = arith.constant 5.000000e-01 : f32
    %124 = vector.broadcast %cst_73 : f32 to vector<8x128xf32>
    %125 = arith.mulf %124, %123 : vector<8x128xf32>
    %126 = vector.extract_strided_slice %109 {offsets = [0, 256], sizes = [8, 128], strides = [1, 1]} : vector<8x512xf32> to vector<8x128xf32>
    %127 = math.tanh %126 : vector<8x128xf32>
    %128 = vector.extract_strided_slice %109 {offsets = [0, 384], sizes = [8, 128], strides = [1, 1]} : vector<8x512xf32> to vector<8x128xf32>
    %cst_74 = arith.constant 5.000000e-01 : f32
    %129 = vector.broadcast %cst_74 : f32 to vector<8x128xf32>
    %130 = arith.mulf %129, %128 : vector<8x128xf32>
    %131 = math.tanh %130 : vector<8x128xf32>
    %cst_75 = arith.constant 1.000000e+00 : f32
    %132 = vector.broadcast %cst_75 : f32 to vector<8x128xf32>
    %133 = arith.addf %131, %132 : vector<8x128xf32>
    %cst_76 = arith.constant 5.000000e-01 : f32
    %134 = vector.broadcast %cst_76 : f32 to vector<8x128xf32>
    %135 = arith.mulf %134, %133 : vector<8x128xf32>
    %136 = arith.mulf %125, %103 : vector<8x128xf32>
    %137 = arith.mulf %117, %127 : vector<8x128xf32>
    %138 = arith.addf %136, %137 : vector<8x128xf32>
    %139 = math.tanh %138 : vector<8x128xf32>
    %140 = arith.mulf %135, %139 : vector<8x128xf32>
    %c0_77 = arith.constant 0 : index
    %c0_78 = arith.constant 0 : index
    %141 = vector.load %arg9[%c0_77, %c0_78] : memref<8x128xf32, #tpu.memory_space<vmem>>, vector<8x128xf32>
    tpu.vector_store %arg9[%c0_77, %c0_78], %140 {strides = array<i32>} : memref<8x128xf32, #tpu.memory_space<vmem>>, vector<8x128xf32>,
    %c0_79 = arith.constant 0 : index
    %c0_80 = arith.constant 0 : index
    %142 = vector.load %arg10[%c0_79, %c0_80] : memref<8x128xf32, #tpu.memory_space<vmem>>, vector<8x128xf32>
    tpu.vector_store %arg10[%c0_79, %c0_80], %138 {strides = array<i32>} : memref<8x128xf32, #tpu.memory_space<vmem>>, vector<8x128xf32>,
    %143 = arith.index_cast %c2_i32 : i32 to index
    %c0_81 = arith.constant 0 : index
    %c0_82 = arith.constant 0 : index
    %144 = vector.load %arg8[%143, %c0_81, %c0_82] : memref<4x8x128xf32, #tpu.memory_space<vmem>>, vector<1x8x128xf32>
    %145 = vector.shape_cast %144 : vector<1x8x128xf32> to vector<8x128xf32>
    %146 = vector.shape_cast %140 : vector<8x128xf32> to vector<1x8x128xf32>
    tpu.vector_store %arg8[%143, %c0_81, %c0_82], %146 {strides = array<i32>} : memref<4x8x128xf32, #tpu.memory_space<vmem>>, vector<1x8x128xf32>,
    %c3_i32 = arith.constant 3 : i32
    %c0_83 = arith.constant 0 : index
    %c0_84 = arith.constant 0 : index
    %147 = vector.load %arg9[%c0_83, %c0_84] : memref<8x128xf32, #tpu.memory_space<vmem>>, vector<8x128xf32>
    %c0_85 = arith.constant 0 : index
    %c0_86 = arith.constant 0 : index
    %148 = vector.load %arg10[%c0_85, %c0_86] : memref<8x128xf32, #tpu.memory_space<vmem>>, vector<8x128xf32>
    %149 = arith.index_cast %c3_i32 : i32 to index
    %c0_87 = arith.constant 0 : index
    %c0_88 = arith.constant 0 : index
    %150 = vector.load %arg11[%149, %c0_87, %c0_88] : memref<4x8x512xf32, #tpu.memory_space<vmem>>, vector<1x8x512xf32>
    %151 = vector.shape_cast %150 : vector<1x8x512xf32> to vector<8x512xf32>
    %c0_89 = arith.constant 0 : index
    %c0_90 = arith.constant 0 : index
    %152 = vector.load %arg4[%c0_89, %c0_90] : memref<128x512xf32, #tpu.memory_space<vmem>>, vector<128x512xf32>
    %cst_91 = arith.constant dense<0.000000e+00> : vector<8x512xf32>
    %153 = tpu.matmul %147, %152, %cst_91 {dimension_numbers = #tpu.dot_dimension_numbers<[1], [0], [0], [1], [0, 0, 1, 1], [], []>} : vector<8x128xf32>, vector<128x512xf32>, vector<8x512xf32> -> vector<8x512xf32>
    %154 = arith.addf %151, %153 : vector<8x512xf32>
    %155 = vector.extract_strided_slice %154 {offsets = [0, 0], sizes = [8, 128], strides = [1, 1]} : vector<8x512xf32> to vector<8x128xf32>
    %cst_92 = arith.constant 5.000000e-01 : f32
    %156 = vector.broadcast %cst_92 : f32 to vector<8x128xf32>
    %157 = arith.mulf %156, %155 : vector<8x128xf32>
    %158 = math.tanh %157 : vector<8x128xf32>
    %cst_93 = arith.constant 1.000000e+00 : f32
    %159 = vector.broadcast %cst_93 : f32 to vector<8x128xf32>
    %160 = arith.addf %158, %159 : vector<8x128xf32>
    %cst_94 = arith.constant 5.000000e-01 : f32
    %161 = vector.broadcast %cst_94 : f32 to vector<8x128xf32>
    %162 = arith.mulf %161, %160 : vector<8x128xf32>
    %163 = vector.extract_strided_slice %154 {offsets = [0, 128], sizes = [8, 128], strides = [1, 1]} : vector<8x512xf32> to vector<8x128xf32>
    %cst_95 = arith.constant 5.000000e-01 : f32
    %164 = vector.broadcast %cst_95 : f32 to vector<8x128xf32>
    %165 = arith.mulf %164, %163 : vector<8x128xf32>
    %166 = math.tanh %165 : vector<8x128xf32>
    %cst_96 = arith.constant 1.000000e+00 : f32
    %167 = vector.broadcast %cst_96 : f32 to vector<8x128xf32>
    %168 = arith.addf %166, %167 : vector<8x128xf32>
    %cst_97 = arith.constant 5.000000e-01 : f32
    %169 = vector.broadcast %cst_97 : f32 to vector<8x128xf32>
    %170 = arith.mulf %169, %168 : vector<8x128xf32>
    %171 = vector.extract_strided_slice %154 {offsets = [0, 256], sizes = [8, 128], strides = [1, 1]} : vector<8x512xf32> to vector<8x128xf32>
    %172 = math.tanh %171 : vector<8x128xf32>
    %173 = vector.extract_strided_slice %154 {offsets = [0, 384], sizes = [8, 128], strides = [1, 1]} : vector<8x512xf32> to vector<8x128xf32>
    %cst_98 = arith.constant 5.000000e-01 : f32
    %174 = vector.broadcast %cst_98 : f32 to vector<8x128xf32>
    %175 = arith.mulf %174, %173 : vector<8x128xf32>
    %176 = math.tanh %175 : vector<8x128xf32>
    %cst_99 = arith.constant 1.000000e+00 : f32
    %177 = vector.broadcast %cst_99 : f32 to vector<8x128xf32>
    %178 = arith.addf %176, %177 : vector<8x128xf32>
    %cst_100 = arith.constant 5.000000e-01 : f32
    %179 = vector.broadcast %cst_100 : f32 to vector<8x128xf32>
    %180 = arith.mulf %179, %178 : vector<8x128xf32>
    %181 = arith.mulf %170, %148 : vector<8x128xf32>
    %182 = arith.mulf %162, %172 : vector<8x128xf32>
    %183 = arith.addf %181, %182 : vector<8x128xf32>
    %184 = math.tanh %183 : vector<8x128xf32>
    %185 = arith.mulf %180, %184 : vector<8x128xf32>
    %c0_101 = arith.constant 0 : index
    %c0_102 = arith.constant 0 : index
    %186 = vector.load %arg9[%c0_101, %c0_102] : memref<8x128xf32, #tpu.memory_space<vmem>>, vector<8x128xf32>
    tpu.vector_store %arg9[%c0_101, %c0_102], %185 {strides = array<i32>} : memref<8x128xf32, #tpu.memory_space<vmem>>, vector<8x128xf32>,
    %c0_103 = arith.constant 0 : index
    %c0_104 = arith.constant 0 : index
    %187 = vector.load %arg10[%c0_103, %c0_104] : memref<8x128xf32, #tpu.memory_space<vmem>>, vector<8x128xf32>
    tpu.vector_store %arg10[%c0_103, %c0_104], %183 {strides = array<i32>} : memref<8x128xf32, #tpu.memory_space<vmem>>, vector<8x128xf32>,
    %188 = arith.index_cast %c3_i32 : i32 to index
    %c0_105 = arith.constant 0 : index
    %c0_106 = arith.constant 0 : index
    %189 = vector.load %arg8[%188, %c0_105, %c0_106] : memref<4x8x128xf32, #tpu.memory_space<vmem>>, vector<1x8x128xf32>
    %190 = vector.shape_cast %189 : vector<1x8x128xf32> to vector<8x128xf32>
    %191 = vector.shape_cast %185 : vector<8x128xf32> to vector<1x8x128xf32>
    tpu.vector_store %arg8[%188, %c0_105, %c0_106], %191 {strides = array<i32>} : memref<4x8x128xf32, #tpu.memory_space<vmem>>, vector<1x8x128xf32>,
    %c4_i32 = arith.constant 4 : i32
    return
  }
  func.func @transform_0(%arg0: i32, %arg1: i32) -> (i32, i32, i32) {
    %c0_i32 = arith.constant 0 : i32
    %c0_i32_0 = arith.constant 0 : i32
    return %arg1, %arg0, %c0_i32 : i32, i32, i32
  }
  func.func @transform_1(%arg0: i32, %arg1: i32) -> (i32, i32) {
    %c0_i32 = arith.constant 0 : i32
    %c0_i32_0 = arith.constant 0 : i32
    %c0_i32_1 = arith.constant 0 : i32
    return %c0_i32, %c0_i32_0 : i32, i32
  }
  func.func @transform_2(%arg0: i32, %arg1: i32) -> (i32, i32) {
    %c0_i32 = arith.constant 0 : i32
    %c0_i32_0 = arith.constant 0 : i32
    %c0_i32_1 = arith.constant 0 : i32
    return %c0_i32, %c0_i32_0 : i32, i32
  }
  func.func @transform_3(%arg0: i32, %arg1: i32) -> (i32, i32) {
    %c0_i32 = arith.constant 0 : i32
    %c0_i32_0 = arith.constant 0 : i32
    %c0_i32_1 = arith.constant 0 : i32
    return %c0_i32, %c0_i32_0 : i32, i32
  }
  func.func @transform_4(%arg0: i32, %arg1: i32) -> (i32, i32) {
    %c0_i32 = arith.constant 0 : i32
    %c0_i32_0 = arith.constant 0 : i32
    return %arg0, %c0_i32 : i32, i32
  }
  func.func @transform_5(%arg0: i32, %arg1: i32) -> (i32, i32) {
    %c0_i32 = arith.constant 0 : i32
    %c0_i32_0 = arith.constant 0 : i32
    return %arg0, %c0_i32 : i32, i32
  }
  func.func @transform_6(%arg0: i32, %arg1: i32) -> (i32, i32, i32) {
    %c0_i32 = arith.constant 0 : i32
    %c0_i32_0 = arith.constant 0 : i32
    return %arg1, %arg0, %c0_i32 : i32, i32, i32
  }
}

</mosaic_0001>

<llo_original>
// kernel: tpu_custom_call.1
$region0: #{tpu_custom_call.1}
  #allocation0 [shape = 'u32[]', space=smem, size = 0x4, offset = 0x4, fixed_abs, tag = 'smem constant byte address 0x4 - core index']
  #allocation1 [shape = 'u32[144,128]{1,0:T(1,128)}', space=vmem, size = 0x12000, scoped, tag = 'internal scratch']
  #allocation2 [shape = 'f32[8,128]{1,0:T(8,128)}', space=vmem, size = 0x1000, scoped, tag = 'scratch operand']
  #allocation3 [shape = 'f32[8,128]{1,0:T(8,128)}', space=vmem, size = 0x1000, scoped, tag = 'scratch operand']
  #allocation4 [shape = 'f32[4,8,512]{2,1,0:T(8,128)}', space=vmem, size = 0x10000, scoped, tag = 'scratch operand']
  %s0 = inlined_call_operand.vmem [shape: f32[12,16,10], index: 0, kind: input, shape index: {}]
  %s1 = inlined_call_operand.vmem [shape: f32[10,512], index: 1, kind: input, shape index: {}]
  %s2 = inlined_call_operand.hbm [shape: f32[128,512], index: 2, kind: input, shape index: {}]
  %s3 = inlined_call_operand.vmem [shape: f32[1,512], index: 3, kind: input, shape index: {}]
  %s4 = inlined_call_operand.vmem [shape: f32[16,128], index: 4, kind: input, shape index: {}]
  %s5 = inlined_call_operand.vmem [shape: f32[16,128], index: 5, kind: input, shape index: {}]
  %s6 = inlined_call_operand.hbm [shape: f32[12,16,128], index: 6, kind: output, shape index: {}]
  %s7 = sld [smem:[#allocation0]]
  $region103: #{tpu_custom_call.1} parent=0
    _
  %s9 = ssub.s32 1, %s7
  %s10 = scalar_select 0, %s9, %s7
  $region1: #{tpu_custom_call.1} parent=0
    #allocation5 [shape = 'u8[32768]{0}', space=vmem, size = 0x8000, scoped, tag = 'input window, operand 0']
    #allocation6 [shape = 'u8[262144]{0}', space=vmem, size = 0x40000, scoped, tag = 'input window, operand 2, single buffered']
    #allocation7 [shape = 's32[2]{0}', space=sflag, size = 0x8, scoped, tag = 'scoped memory for tpu_custom_call.1']
    #allocation8 [shape = 's32[2]{0}', space=sflag, size = 0x8, scoped, tag = 'scoped memory for tpu_custom_call.1']
    #allocation9 [shape = 'u8[32768]{0}', space=vmem, size = 0x8000, scoped, tag = 'output window, operand 0']
    %11 = vsyncpa [#allocation7], 0
    %12 = vsyncpa [#allocation8], 0
    %s13 = scalar_lea.sflag [#allocation8], 1
    %14 = vsyncpa %s13, 0
    loop: start=0, step=1, limit=8
    $region2: #{tpu_custom_call.1} parent=1 // loop_pre_header
      _
    $region3: #{tpu_custom_call.1} parent=1 // loop_header
      %s16 = sphi 0, %s20
      %p17 = scmp.ge.s32.totalorder %s16, 8
      %s23 = sphi 0, %s35
      %s24 = sphi 0, %s31
      %s25 = sphi 0, %s23
      %s26 = sphi 0, %s24
      %s27 = sphi 0, %s25
      %s28 = sphi 0, %s26
      %s40 = sphi 0, %s42
      %s43 = sphi 0, %s40
      %s44 = sphi 0, %s43
      %s60 = sphi 0, %s44
      %s64 = sphi 0, %s64
      %s66 = sphi 0, %s64
      %s67 = sphi 0, %s66
      %s81 = sphi 0, %s67
      %s85 = sphi 0, %s85
      %s87 = sphi 0, %s85
      %s88 = sphi 0, %s87
      %s102 = sphi 0, %s88
      %s106 = sphi 0, %s106
      %s108 = sphi 0, %s106
      %s109 = sphi 0, %s108
      %s123 = sphi 0, %s109
      %s129 = sphi 0, %s131
      %s132 = sphi 0, %s129
      %s133 = sphi 0, %s132
      %s149 = sphi 0, %s133
      %s155 = sphi 0, %s157
      %s158 = sphi 0, %s155
      %s159 = sphi 0, %s158
      %s175 = sphi 0, %s159
      %s183 = sphi 0, %s185
      %s186 = sphi 0, %s183
      %s187 = sphi 0, %s186
      %s203 = sphi 0, %s187
    $region4: #{tpu_custom_call.1} parent=1 // loop_header_branch
      %19 = sbr.rel (%p17) target = $region8
    $region5: #{tpu_custom_call.1} parent=1 // loop_body
      %s21 = ssub.s32 %s16, 1
      %s22 = ssub.s32 %s16, 2
      %s29 = sadd.s32 1, %s24
      %p30 = scmp.ge.s32.totalorder %s29, 3
      %s31 = scalar_select %p30, 0, %s29
      %s32 = sadd.s32 1, %s23
      %s33 = scalar_select %p30, %s32, %s23
      %p34 = scmp.ge.s32.totalorder %s33, 2
      %s35 = scalar_select %p34, 0, %s33
      %s36 = ssub.s32 %s24, %s31
      %s37 = ssub.s32 %s23, %s35
      %s38 = sor.u32 %s36, %s37
      %p39 = scmp.eq.s32.totalorder %s38, 0
      %s41 = sadd.s32 %s40, 1
      %s42 = scalar_select %p39, %s40, %s41
      %p45 = pneg %p39
      %p46 = scmp.eq.s32.totalorder %s16, 5
      %p47 = por %p45, %p46
      %p48 = scmp.ne.s32.totalorder %s40, %s43
      %p49 = scmp.eq.s32.totalorder %s16, 0
      %p50 = por %p48, %p49
      %p51 = scmp.ne.s32.totalorder %s40, %s43
      %p52 = scmp.eq.s32.totalorder %s21, 5
      %p53 = por %p51, %p52
      %p54 = scmp.ne.s32.totalorder %s43, %s44
      %p55 = scmp.eq.s32.totalorder %s21, 0
      %p56 = por %p54, %p55
      %p57 = scmp.ne.s32.totalorder %s43, %s44
      %p58 = scmp.eq.s32.totalorder %s22, 5
      %p59 = por %p57, %p58
      %p61 = scmp.ne.s32.totalorder %s44, %s60
      %p62 = scmp.eq.s32.totalorder %s22, 0
      %p63 = por %p61, %p62
      %s65 = sadd.s32 %s64, 1
      %p68 = scmp.eq.s32.totalorder %s16, 5
      %p69 = scmp.ne.s32.totalorder %s64, %s66
      %p70 = scmp.eq.s32.totalorder %s16, 0
      %p71 = por %p69, %p70
      %p72 = scmp.ne.s32.totalorder %s64, %s66
      %p73 = scmp.eq.s32.totalorder %s21, 5
      %p74 = por %p72, %p73
      %p75 = scmp.ne.s32.totalorder %s66, %s67
      %p76 = scmp.eq.s32.totalorder %s21, 0
      %p77 = por %p75, %p76
      %p78 = scmp.ne.s32.totalorder %s66, %s67
      %p79 = scmp.eq.s32.totalorder %s22, 5
      %p80 = por %p78, %p79
      %p82 = scmp.ne.s32.totalorder %s67, %s81
      %p83 = scmp.eq.s32.totalorder %s22, 0
      %p84 = por %p82, %p83
      %s86 = sadd.s32 %s85, 1
      %p89 = scmp.eq.s32.totalorder %s16, 5
      %p90 = scmp.ne.s32.totalorder %s85, %s87
      %p91 = scmp.eq.s32.totalorder %s16, 0
      %p92 = por %p90, %p91
      %p93 = scmp.ne.s32.totalorder %s85, %s87
      %p94 = scmp.eq.s32.totalorder %s21, 5
      %p95 = por %p93, %p94
      %p96 = scmp.ne.s32.totalorder %s87, %s88
      %p97 = scmp.eq.s32.totalorder %s21, 0
      %p98 = por %p96, %p97
      %p99 = scmp.ne.s32.totalorder %s87, %s88
      %p100 = scmp.eq.s32.totalorder %s22, 5
      %p101 = por %p99, %p100
      %p103 = scmp.ne.s32.totalorder %s88, %s102
      %p104 = scmp.eq.s32.totalorder %s22, 0
      %p105 = por %p103, %p104
      %s107 = sadd.s32 %s106, 1
      %p110 = scmp.eq.s32.totalorder %s16, 5
      %p111 = scmp.ne.s32.totalorder %s106, %s108
      %p112 = scmp.eq.s32.totalorder %s16, 0
      %p113 = por %p111, %p112
      %p114 = scmp.ne.s32.totalorder %s106, %s108
      %p115 = scmp.eq.s32.totalorder %s21, 5
      %p116 = por %p114, %p115
      %p117 = scmp.ne.s32.totalorder %s108, %s109
      %p118 = scmp.eq.s32.totalorder %s21, 0
      %p119 = por %p117, %p118
      %p120 = scmp.ne.s32.totalorder %s108, %s109
      %p121 = scmp.eq.s32.totalorder %s22, 5
      %p122 = por %p120, %p121
      %p124 = scmp.ne.s32.totalorder %s109, %s123
      %p125 = scmp.eq.s32.totalorder %s22, 0
      %p126 = por %p124, %p125
      %s127 = ssub.s32 %s23, %s35
      %p128 = scmp.eq.s32.totalorder %s127, 0
      %s130 = sadd.s32 %s129, 1
      %s131 = scalar_select %p128, %s129, %s130
      %p134 = pneg %p128
      %p135 = scmp.eq.s32.totalorder %s16, 5
      %p136 = por %p134, %p135
      %p137 = scmp.ne.s32.totalorder %s129, %s132
      %p138 = scmp.eq.s32.totalorder %s16, 0
      %p139 = por %p137, %p138
      %p140 = scmp.ne.s32.totalorder %s129, %s132
      %p141 = scmp.eq.s32.totalorder %s21, 5
      %p142 = por %p140, %p141
      %p143 = scmp.ne.s32.totalorder %s132, %s133
      %p144 = scmp.eq.s32.totalorder %s21, 0
      %p145 = por %p143, %p144
      %p146 = scmp.ne.s32.totalorder %s132, %s133
      %p147 = scmp.eq.s32.totalorder %s22, 5
      %p148 = por %p146, %p147
      %p150 = scmp.ne.s32.totalorder %s133, %s149
      %p151 = scmp.eq.s32.totalorder %s22, 0
      %p152 = por %p150, %p151
      %s153 = ssub.s32 %s23, %s35
      %p154 = scmp.eq.s32.totalorder %s153, 0
      %s156 = sadd.s32 %s155, 1
      %s157 = scalar_select %p154, %s155, %s156
      %p160 = pneg %p154
      %p161 = scmp.eq.s32.totalorder %s16, 5
      %p162 = por %p160, %p161
      %p163 = scmp.ne.s32.totalorder %s155, %s158
      %p164 = scmp.eq.s32.totalorder %s16, 0
      %p165 = por %p163, %p164
      %p166 = scmp.ne.s32.totalorder %s155, %s158
      %p167 = scmp.eq.s32.totalorder %s21, 5
      %p168 = por %p166, %p167
      %p169 = scmp.ne.s32.totalorder %s158, %s159
      %p170 = scmp.eq.s32.totalorder %s21, 0
      %p171 = por %p169, %p170
      %p172 = scmp.ne.s32.totalorder %s158, %s159
      %p173 = scmp.eq.s32.totalorder %s22, 5
      %p174 = por %p172, %p173
      %p176 = scmp.ne.s32.totalorder %s159, %s175
      %p177 = scmp.eq.s32.totalorder %s22, 0
      %p178 = por %p176, %p177
      %s179 = ssub.s32 %s24, %s31
      %s180 = ssub.s32 %s23, %s35
      %s181 = sor.u32 %s179, %s180
      %p182 = scmp.eq.s32.totalorder %s181, 0
      %s184 = sadd.s32 %s183, 1
      %s185 = scalar_select %p182, %s183, %s184
      %p188 = pneg %p182
      %p189 = scmp.eq.s32.totalorder %s16, 5
      %p190 = por %p188, %p189
      %p191 = scmp.ne.s32.totalorder %s183, %s186
      %p192 = scmp.eq.s32.totalorder %s16, 0
      %p193 = por %p191, %p192
      %p194 = scmp.ne.s32.totalorder %s183, %s186
      %p195 = scmp.eq.s32.totalorder %s21, 5
      %p196 = por %p194, %p195
      %p197 = scmp.ne.s32.totalorder %s186, %s187
      %p198 = scmp.eq.s32.totalorder %s21, 0
      %p199 = por %p197, %p198
      %p200 = scmp.ne.s32.totalorder %s186, %s187
      %p201 = scmp.eq.s32.totalorder %s22, 5
      %p202 = por %p200, %p201
      %p204 = scmp.ne.s32.totalorder %s187, %s203
      %p205 = scmp.eq.s32.totalorder %s22, 0
      %p206 = por %p204, %p205
      %p207 = scmp.le.s32.totalorder 1, %s16
      %p208 = scmp.lt.s32.totalorder %s16, 7
      %p209 = pnand %p207, %p208
      %p210 = pneg %p209
      // Predicated region
      $region9: #{tpu_custom_call.1} parent=5 // pred_check
        _
      $region10: #{tpu_custom_call.1} parent=5 // pred_check_branch
        %212 = sbr.rel (%p209) target = $region12
      $region11: #{tpu_custom_call.1} parent=5 // pred_region
        %s213 = ssub.s32 %s16, 1
        // Predicated region
        $region13: #{tpu_custom_call.1} parent=11 // pred_check
          %p214 = pneg %p77
        $region14: #{tpu_custom_call.1} parent=11 // pred_check_branch
          %216 = sbr.rel (%p214) target = $region16
        $region15: #{tpu_custom_call.1} parent=11 // pred_region
          _
        $region16: #{tpu_custom_call.1} parent=11 // pred_fallthru
          _
        // Predicated region
        $region17: #{tpu_custom_call.1} parent=11 // pred_check
          %p217 = pneg %p98
        $region18: #{tpu_custom_call.1} parent=11 // pred_check_branch
          %219 = sbr.rel (%p217) target = $region20
        $region19: #{tpu_custom_call.1} parent=11 // pred_region
          %s221 = ssub.s32 8192, 8192
          %222 = vsyncadd [#allocation7], %s221
          %s223 = sshll.u32 [#allocation6], 4
          %s224 = int_to_ptr.vmem [resolvable:$true] %s223
          %229 = dma.hbm_to_vmem [thread:$0]  %s2, 8192, %s224, [#allocation7], 512, 512, 32
        $region20: #{tpu_custom_call.1} parent=11 // pred_fallthru
          _
        // Predicated region
        $region21: #{tpu_custom_call.1} parent=11 // pred_check
          %p230 = pneg %p119
        $region22: #{tpu_custom_call.1} parent=11 // pred_check_branch
          %232 = sbr.rel (%p230) target = $region24
        $region23: #{tpu_custom_call.1} parent=11 // pred_region
          _
        $region24: #{tpu_custom_call.1} parent=11 // pred_fallthru
          _
      $region12: #{tpu_custom_call.1} parent=5 // pred_fallthru
        _
      %p233 = scmp.lt.s32.totalorder %s16, 6
      // Predicated region
      $region25: #{tpu_custom_call.1} parent=5 // pred_check
        %p234 = pneg %p233
      $region26: #{tpu_custom_call.1} parent=5 // pred_check_branch
        %236 = sbr.rel (%p234) target = $region28
      $region27: #{tpu_custom_call.1} parent=5 // pred_region
        // Predicated region
        $region29: #{tpu_custom_call.1} parent=27 // pred_check
          %p237 = pneg %p50
        $region30: #{tpu_custom_call.1} parent=27 // pred_check_branch
          %239 = sbr.rel (%p237) target = $region32
        $region31: #{tpu_custom_call.1} parent=27 // pred_region
          %s240 = sand.u32 %s40, 1
          %s241 = sand.u32 %s40, 1
          %s242 = smul.addr %s241, 32
          %s243 = scalar_lea.vmem [#allocation5], %s242
          %s244 = smul.u32 4, %s24
          %s245 = smul.addr %s244, 2
          %s246 = sadd.s32 %s23, %s245
          %s247 = smul.addr %s246, 8
          %s248 = scalar_lea.vmem %s0, %s247
          // Predicated region
          $region33: #{tpu_custom_call.1} parent=31 // pred_check
            _
          $region34: #{tpu_custom_call.1} parent=31 // pred_check_branch
            %250 = sbr.rel (0) target = $region36
          $region35: #{tpu_custom_call.1} parent=31 // pred_region
            // Predicated region
            $region37: #{tpu_custom_call.1} parent=35 // pred_check
              _
            $region38: #{tpu_custom_call.1} parent=35 // pred_check_branch
              %252 = sbr.rel (0) target = $region40
            $region39: #{tpu_custom_call.1} parent=35 // pred_region
              // Predicated region
              $region52: #{tpu_custom_call.1} parent=39 // pred_check
                _
              $region53: #{tpu_custom_call.1} parent=39 // pred_check_branch
                %273 = sbr.rel (0) target = $region55
              $region54: #{tpu_custom_call.1} parent=39 // pred_region
                loop: start=0, step=1, limit=1
                $region56: #{tpu_custom_call.1} parent=54 // loop_pre_header
                  _
                $region57: #{tpu_custom_call.1} parent=54 // loop_header
                  %s275 = sphi 0, %s279
                  %p276 = scmp.ge.s32.totalorder %s275, 1
                  %s280 = sphi %s248, %s248
                  %s281 = sphi %s243, %s243
                $region58: #{tpu_custom_call.1} parent=54 // loop_header_branch
                  %278 = sbr.rel (%p276) target = $region62
                $region59: #{tpu_custom_call.1} parent=54 // loop_body
                  %v282 = vld [vmem:[%s280] sm:$0xff]
                  %283 = vst [vmem:[%s281] sm:$0xff] %v282
                  %v284 = vld [vmem:[%s280 + $0x10] sm:$0xff]
                  %285 = vst [vmem:[%s281 + $0x8] sm:$0xff] %v284
                  %v286 = vld [vmem:[%s280 + $0x20] sm:$0xff]
                  %287 = vst [vmem:[%s281 + $0x10] sm:$0xff] %v286
                  %v288 = vld [vmem:[%s280 + $0x30] sm:$0xff]
                  %289 = vst [vmem:[%s281 + $0x18] sm:$0xff] %v288
                $region60: #{tpu_custom_call.1} parent=54 // loop_footer
                  %s279 = sadd.s32 1, %s275
                $region61: #{tpu_custom_call.1} parent=54 // loop_footer_branch
                  %274 = sbr.rel target = $region57
                $region62: #{tpu_custom_call.1} parent=54 // loop_exit
                  _
              $region55: #{tpu_custom_call.1} parent=39 // pred_fallthru
                _
              // Predicated region
              $region63: #{tpu_custom_call.1} parent=39 // pred_check
                _
              $region64: #{tpu_custom_call.1} parent=39 // pred_check_branch
                %291 = sbr.rel target = $region66
              $region65: #{tpu_custom_call.1} parent=39 // pred_region
                _
              $region66: #{tpu_custom_call.1} parent=39 // pred_fallthru
                _
            $region40: #{tpu_custom_call.1} parent=35 // pred_fallthru
              _
            // Predicated region
            $region41: #{tpu_custom_call.1} parent=35 // pred_check
              _
            $region42: #{tpu_custom_call.1} parent=35 // pred_check_branch
              %254 = sbr.rel target = $region44
            $region43: #{tpu_custom_call.1} parent=35 // pred_region
              loop: start=0, step=1, limit=1
              $region45: #{tpu_custom_call.1} parent=43 // loop_pre_header
                _
              $region46: #{tpu_custom_call.1} parent=43 // loop_header
                %s257 = sphi 0, %s261
                %p258 = scmp.ge.s32.totalorder %s257, 1
                %s262 = sphi %s248, %s248
                %s263 = sphi %s243, %s243
              $region47: #{tpu_custom_call.1} parent=43 // loop_header_branch
                %260 = sbr.rel (%p258) target = $region51
              $region48: #{tpu_custom_call.1} parent=43 // loop_body
                %v264 = vld [vmem:[%s262] sm:$0xff]
                %265 = vst [vmem:[%s263] sm:$0xff] %v264
                %v266 = vld [vmem:[%s262 + $0x10] sm:$0xff]
                %267 = vst [vmem:[%s263 + $0x8] sm:$0xff] %v266
                %v268 = vld [vmem:[%s262 + $0x20] sm:$0xff]
                %269 = vst [vmem:[%s263 + $0x10] sm:$0xff] %v268
                %v270 = vld [vmem:[%s262 + $0x30] sm:$0xff]
                %271 = vst [vmem:[%s263 + $0x18] sm:$0xff] %v270
              $region49: #{tpu_custom_call.1} parent=43 // loop_footer
                %s261 = sadd.s32 1, %s257
              $region50: #{tpu_custom_call.1} parent=43 // loop_footer_branch
                %256 = sbr.rel target = $region46
              $region51: #{tpu_custom_call.1} parent=43 // loop_exit
                _
            $region44: #{tpu_custom_call.1} parent=35 // pred_fallthru
              _
          $region36: #{tpu_custom_call.1} parent=31 // pred_fallthru
            _
          %292 = vnop
        $region32: #{tpu_custom_call.1} parent=27 // pred_fallthru
          _
        // Predicated region
        $region67: #{tpu_custom_call.1} parent=27 // pred_check
          %p293 = pneg %p139
        $region68: #{tpu_custom_call.1} parent=27 // pred_check_branch
          %295 = sbr.rel (%p293) target = $region70
        $region69: #{tpu_custom_call.1} parent=27 // pred_region
          %p296 = scmp.lt.s32.totalorder %s23, 1
          %s297 = scalar_select %p296, %s23, 1
          %s298 = smul.addr %s297, 8
          %s299 = scalar_lea.vmem %s4, %s298
        $region70: #{tpu_custom_call.1} parent=27 // pred_fallthru
          _
        // Predicated region
        $region71: #{tpu_custom_call.1} parent=27 // pred_check
          %p300 = pneg %p165
        $region72: #{tpu_custom_call.1} parent=27 // pred_check_branch
          %302 = sbr.rel (%p300) target = $region74
        $region73: #{tpu_custom_call.1} parent=27 // pred_region
          %p303 = scmp.lt.s32.totalorder %s23, 1
          %s304 = scalar_select %p303, %s23, 1
          %s305 = smul.addr %s304, 8
          %s306 = scalar_lea.vmem %s5, %s305
        $region74: #{tpu_custom_call.1} parent=27 // pred_fallthru
          _
      $region28: #{tpu_custom_call.1} parent=5 // pred_fallthru
        _
      %p307 = scmp.le.s32.totalorder 1, %s16
      %p308 = scmp.lt.s32.totalorder %s16, 7
      %p309 = pnand %p307, %p308
      %p310 = pneg %p309
      // Predicated region
      $region75: #{tpu_custom_call.1} parent=5 // pred_check
        _
      $region76: #{tpu_custom_call.1} parent=5 // pred_check_branch
        %312 = sbr.rel (%p309) target = $region78
      $region77: #{tpu_custom_call.1} parent=5 // pred_region
        %s313 = ssub.s32 %s16, 1
        %s314 = sand.u32 %s43, 1
        %s315 = sand.u32 %s43, 1
        %s316 = smul.addr %s315, 32
        %s317 = scalar_lea.vmem [#allocation5], %s316
        // Predicated region
        $region79: #{tpu_custom_call.1} parent=77 // pred_check
          %p318 = pneg %p56
        $region80: #{tpu_custom_call.1} parent=77 // pred_check_branch
          %320 = sbr.rel (%p318) target = $region82
        $region81: #{tpu_custom_call.1} parent=77 // pred_region
          _
        $region82: #{tpu_custom_call.1} parent=77 // pred_fallthru
          _
        // Predicated region
        $region83: #{tpu_custom_call.1} parent=77 // pred_check
          %p321 = pneg %p98
        $region84: #{tpu_custom_call.1} parent=77 // pred_check_branch
          %323 = sbr.rel (%p321) target = $region86
        $region85: #{tpu_custom_call.1} parent=77 // pred_region
          %324 = dma.done [#allocation7], 8192
        $region86: #{tpu_custom_call.1} parent=77 // pred_fallthru
          _
        %s325 = sand.u32 %s43, 1
        %s326 = sand.u32 %s43, 1
        %s327 = smul.addr %s326, 32
        %s328 = scalar_lea.vmem [#allocation5], %s327
        %p329 = pneg %p56
        %p330 = pneg %p53
        %p331 = pneg %p77
        %p332 = pneg %p74
        %p333 = pneg %p98
        %p334 = pneg %p95
        %p335 = pneg %p119
        %p336 = pneg %p116
        %p337 = scmp.lt.s32.totalorder %s25, 1
        %s338 = scalar_select %p337, %s25, 1
        %s339 = smul.addr %s338, 8
        %s340 = scalar_lea.vmem %s4, %s339
        %p341 = pneg %p145
        %p342 = pneg %p142
        %p343 = scmp.lt.s32.totalorder %s25, 1
        %s344 = scalar_select %p343, %s25, 1
        %s345 = smul.addr %s344, 8
        %s346 = scalar_lea.vmem %s5, %s345
        %p347 = pneg %p171
        %p348 = pneg %p168
        %p349 = pneg %p199
        %p350 = pneg %p196
        %s351 = sand.u32 %s186, 1
        %s352 = scalar_lea.sflag [#allocation8], %s351
        %s353 = sand.u32 %s186, 1
        %s354 = smul.addr %s353, 32
        %s355 = scalar_lea.vmem [#allocation9], %s354
        %s356 = smul.u32 4, %s26
        %p357 = scmp.lt.s32.totalorder %s25, 1
        %s358 = scalar_select %p357, %s25, 1
        %s359 = smul.addr %s358, 8
        %s360 = scalar_lea.vmem %s4, %s359
        %p361 = scmp.lt.s32.totalorder %s25, 1
        %s362 = scalar_select %p361, %s25, 1
        %s363 = smul.addr %s362, 8
        %s364 = scalar_lea.vmem %s5, %s363
        %s365 = smul.u32 4, %s26
        %p366 = scmp.eq.s32.totalorder %s26, 0
        // Predicated region
        $region87: #{tpu_custom_call.1} parent=77 // pred_check
          %p367 = pneg %p366
        $region88: #{tpu_custom_call.1} parent=77 // pred_check_branch
          %369 = sbr.rel (%p367) target = $region90
        $region89: #{tpu_custom_call.1} parent=77 // pred_region
          %v370 = vld [vmem:[%s360] sm:$0xff]
          %371 = vst [vmem:[#allocation2] sm:$0xff] %v370
          %v372 = vld [vmem:[%s364] sm:$0xff]
          %373 = vst [vmem:[#allocation3] sm:$0xff] %v372
        $region90: #{tpu_custom_call.1} parent=77 // pred_fallthru
          _
        %v374 = vld [vmem:[%s317] sm:$0xff]
        %v375 = vld [vmem:[%s317 + $0x8] sm:$0xff]
        %v376 = vld [vmem:[%s317 + $0x10] sm:$0xff]
        %v377 = vld [vmem:[%s317 + $0x18] sm:$0xff]
        %v378 = vld [vmem:[%s1] sm:$0xff]
        %v379 = vld [vmem:[%s1 + $0x8] sm:$0xff]
        %v380 = vld [vmem:[%s1 + $0x10] sm:$0xff]
        %v381 = vld [vmem:[%s1 + $0x18] sm:$0xff]
        %v382 = vld [vmem:[%s1 + $0x20] sm:$0x3]
        %v383 = vld [vmem:[%s1 + $0x28] sm:$0x3]
        %v384 = vld [vmem:[%s1 + $0x30] sm:$0x3]
        %v385 = vld [vmem:[%s1 + $0x38] sm:$0x3]
        %v386 = vld [vmem:[%s3] sm:$0xf]
        %v388 = vlaneseq
        %v389 = vshrl.u32 %v388, 7
        %v390 = vsub.s32 0, %v389
        %v391 = vrot.slane %v386, %v390
        %v392 = vlaneseq
        %v393 = vshrl.u32 %v392, 7
        %v394 = vsub.s32 1, %v393
        %v395 = vrot.slane %v386, %v394
        %v396 = vlaneseq
        %v397 = vshrl.u32 %v396, 7
        %v398 = vsub.s32 2, %v397
        %v399 = vrot.slane %v386, %v398
        %v400 = vlaneseq
        %v401 = vshrl.u32 %v400, 7
        %v402 = vsub.s32 3, %v401
        %v403 = vrot.slane %v386, %v402
        %vm408 = vcmask 80896
        %v410 = vsel %vm408, %v374, 0
        %v413 = vsel %vm408, %v375, 0
        %v416 = vsel %vm408, %v376, 0
        %v419 = vsel %vm408, %v377, 0
        %vm421 = vcmask 1041408
        %v423 = vsel %vm421, %v382, 0
        %v426 = vsel %vm421, %v383, 0
        %v429 = vsel %vm421, %v384, 0
        %v432 = vsel %vm421, %v385, 0
        %434 = vmatprep.subr.mxu0 %v379
        %435 = vmatpush1.msra.mxu0 %v378
        %436 = vmatprep.subr.mxu0 %v426
        %437 = vmatpush1.msra.mxu0 %v423
        %438 = vmatprep.subr.mxu0 0.0
        %439 = vmatpush1.msra.mxu0 0.0
        %440 = vmatprep.subr.mxu0 0.0
        %441 = vmatpush1.msra.mxu0 0.0
        %442 = vmatprep.subr.mxu0 0.0
        %443 = vmatpush1.msra.mxu0 0.0
        %444 = vmatprep.subr.mxu0 0.0
        %445 = vmatpush1.msra.mxu0 0.0
        %446 = vmatprep.subr.mxu0 0.0
        %447 = vmatpush1.msra.mxu0 0.0
        %448 = vmatprep.subr.mxu0 0.0
        %449 = vmatpush1.msra.mxu0 0.0
        %450 = vmatprep.subr.mxu0 0.0
        %451 = vmatpush1.msra.mxu0 0.0
        %452 = vmatprep.subr.mxu0 0.0
        %453 = vmatpush1.msra.mxu0 0.0
        %454 = vmatprep.subr.mxu0 0.0
        %455 = vmatpush1.msra.mxu0 0.0
        %456 = vmatprep.subr.mxu0 0.0
        %457 = vmatpush1.msra.mxu0 0.0
        %458 = vmatprep.subr.mxu0 0.0
        %459 = vmatpush1.msra.mxu0 0.0
        %460 = vmatprep.subr.mxu0 0.0
        %461 = vmatpush1.msra.mxu0 0.0
        %462 = vmatprep.subr.mxu0 0.0
        %463 = vmatpush1.msra.mxu0 0.0
        %464 = vmatprep.subr.mxu0 0.0
        %465 = vmatpush1.msra.mxu0 0.0
        %466 = vmatprep.subr.mxu0 0.0
        %467 = vmatpush1.msra.mxu0 0.0
        %468 = vmatprep.subr.mxu0 0.0
        %469 = vmatpush1.msra.mxu0 0.0
        %470 = vmatprep.subr.mxu0 0.0
        %471 = vmatpush1.msra.mxu0 0.0
        %472 = vmatprep.subr.mxu0 0.0
        %473 = vmatpush1.msra.mxu0 0.0
        %474 = vmatprep.subr.mxu0 0.0
        %475 = vmatpush1.msra.mxu0 0.0
        %476 = vmatprep.subr.mxu0 0.0
        %477 = vmatpush1.msra.mxu0 0.0
        %478 = vmatprep.subr.mxu0 0.0
        %479 = vmatpush1.msra.mxu0 0.0
        %480 = vmatprep.subr.mxu0 0.0
        %481 = vmatpush1.msra.mxu0 0.0
        %482 = vmatprep.subr.mxu0 0.0
        %483 = vmatpush1.msra.mxu0 0.0
        %484 = vmatprep.subr.mxu0 0.0
        %485 = vmatpush1.msra.mxu0 0.0
        %486 = vmatprep.subr.mxu0 0.0
        %487 = vmatpush1.msra.mxu0 0.0
        %488 = vmatprep.subr.mxu0 0.0
        %489 = vmatpush1.msra.mxu0 0.0
        %490 = vmatprep.subr.mxu0 0.0
        %491 = vmatpush1.msra.mxu0 0.0
        %492 = vmatprep.subr.mxu0 0.0
        %493 = vmatpush1.msra.mxu0 0.0
        %494 = vmatprep.subr.mxu0 0.0
        %495 = vmatpush1.msra.mxu0 0.0
        %496 = vmatprep.subr.mxu0 0.0
        %497 = vmatpush1.msra.mxu0 0.0
        %498 = vmatprep.mubr.f32.mxu0 0.0
        %499 = vmatmul.mubr.f32.gmra.mrb[0].mxu0 %v410
        %v500 = vpop.f32.mrb[0].mxu0
        %v501 = vadd.f32 %v391, %v500
        %v502 = vpop.f32.mrb[0].mxu0
        %v503 = vadd.f32 %v395, %v502
        %504 = vmatprep.mubr.f32.mxu0 0.0
        %505 = vmatmul.mubr.f32.gmra.mrb[0].mxu0 %v413
        %v506 = vpop.f32.mrb[0].mxu0
        %v507 = vadd.f32 %v391, %v506
        %v508 = vpop.f32.mrb[0].mxu0
        %v509 = vadd.f32 %v395, %v508
        %510 = vmatprep.mubr.f32.mxu0 0.0
        %511 = vmatmul.mubr.f32.gmra.mrb[0].mxu0 %v416
        %v512 = vpop.f32.mrb[0].mxu0
        %v513 = vadd.f32 %v391, %v512
        %v514 = vpop.f32.mrb[0].mxu0
        %v515 = vadd.f32 %v395, %v514
        %516 = vmatprep.mubr.f32.mxu0 0.0
        %517 = vmatmul.mubr.f32.gmra.mrb[0].mxu0 %v419
        %v518 = vpop.f32.mrb[0].mxu0
        %v519 = vadd.f32 %v391, %v518
        %v520 = vpop.f32.mrb[0].mxu0
        %v521 = vadd.f32 %v395, %v520
        %522 = vdwg.mxu0
        %523 = vmatprep.subr.mxu0 %v381
        %524 = vmatpush1.msra.mxu0 %v380
        %525 = vmatprep.subr.mxu0 %v432
        %526 = vmatpush1.msra.mxu0 %v429
        %527 = vmatprep.subr.mxu0 0.0
        %528 = vmatpush1.msra.mxu0 0.0
        %529 = vmatprep.subr.mxu0 0.0
        %530 = vmatpush1.msra.mxu0 0.0
        %531 = vmatprep.subr.mxu0 0.0
        %532 = vmatpush1.msra.mxu0 0.0
        %533 = vmatprep.subr.mxu0 0.0
        %534 = vmatpush1.msra.mxu0 0.0
        %535 = vmatprep.subr.mxu0 0.0
        %536 = vmatpush1.msra.mxu0 0.0
        %537 = vmatprep.subr.mxu0 0.0
        %538 = vmatpush1.msra.mxu0 0.0
        %539 = vmatprep.subr.mxu0 0.0
        %540 = vmatpush1.msra.mxu0 0.0
        %541 = vmatprep.subr.mxu0 0.0
        %542 = vmatpush1.msra.mxu0 0.0
        %543 = vmatprep.subr.mxu0 0.0
        %544 = vmatpush1.msra.mxu0 0.0
        %545 = vmatprep.subr.mxu0 0.0
        %546 = vmatpush1.msra.mxu0 0.0
        %547 = vmatprep.subr.mxu0 0.0
        %548 = vmatpush1.msra.mxu0 0.0
        %549 = vmatprep.subr.mxu0 0.0
        %550 = vmatpush1.msra.mxu0 0.0
        %551 = vmatprep.subr.mxu0 0.0
        %552 = vmatpush1.msra.mxu0 0.0
        %553 = vmatprep.subr.mxu0 0.0
        %554 = vmatpush1.msra.mxu0 0.0
        %555 = vmatprep.subr.mxu0 0.0
        %556 = vmatpush1.msra.mxu0 0.0
        %557 = vmatprep.subr.mxu0 0.0
        %558 = vmatpush1.msra.mxu0 0.0
        %559 = vmatprep.subr.mxu0 0.0
        %560 = vmatpush1.msra.mxu0 0.0
        %561 = vmatprep.subr.mxu0 0.0
        %562 = vmatpush1.msra.mxu0 0.0
        %563 = vmatprep.subr.mxu0 0.0
        %564 = vmatpush1.msra.mxu0 0.0
        %565 = vmatprep.subr.mxu0 0.0
        %566 = vmatpush1.msra.mxu0 0.0
        %567 = vmatprep.subr.mxu0 0.0
        %568 = vmatpush1.msra.mxu0 0.0
        %569 = vmatprep.subr.mxu0 0.0
        %570 = vmatpush1.msra.mxu0 0.0
        %571 = vmatprep.subr.mxu0 0.0
        %572 = vmatpush1.msra.mxu0 0.0
        %573 = vmatprep.subr.mxu0 0.0
        %574 = vmatpush1.msra.mxu0 0.0
        %575 = vmatprep.subr.mxu0 0.0
        %576 = vmatpush1.msra.mxu0 0.0
        %577 = vmatprep.subr.mxu0 0.0
        %578 = vmatpush1.msra.mxu0 0.0
        %579 = vmatprep.subr.mxu0 0.0
        %580 = vmatpush1.msra.mxu0 0.0
        %581 = vmatprep.subr.mxu0 0.0
        %582 = vmatpush1.msra.mxu0 0.0
        %583 = vmatprep.subr.mxu0 0.0
        %584 = vmatpush1.msra.mxu0 0.0
        %585 = vmatprep.subr.mxu0 0.0
        %586 = vmatpush1.msra.mxu0 0.0
        %587 = vmatprep.mubr.f32.mxu0 0.0
        %588 = vmatmul.mubr.f32.gmra.mrb[0].mxu0 %v410
        %v589 = vpop.f32.mrb[0].mxu0
        %v590 = vadd.f32 %v399, %v589
        %v591 = vpop.f32.mrb[0].mxu0
        %v592 = vadd.f32 %v403, %v591
        %593 = vmatprep.mubr.f32.mxu0 0.0
        %594 = vmatmul.mubr.f32.gmra.mrb[0].mxu0 %v413
        %v595 = vpop.f32.mrb[0].mxu0
        %v596 = vadd.f32 %v399, %v595
        %v597 = vpop.f32.mrb[0].mxu0
        %v598 = vadd.f32 %v403, %v597
        %599 = vmatprep.mubr.f32.mxu0 0.0
        %600 = vmatmul.mubr.f32.gmra.mrb[0].mxu0 %v416
        %v601 = vpop.f32.mrb[0].mxu0
        %v602 = vadd.f32 %v399, %v601
        %v603 = vpop.f32.mrb[0].mxu0
        %v604 = vadd.f32 %v403, %v603
        %605 = vmatprep.mubr.f32.mxu0 0.0
        %606 = vmatmul.mubr.f32.gmra.mrb[0].mxu0 %v419
        %v607 = vpop.f32.mrb[0].mxu0
        %v608 = vadd.f32 %v399, %v607
        %v609 = vpop.f32.mrb[0].mxu0
        %v610 = vadd.f32 %v403, %v609
        %611 = vdwg.mxu0
        %612 = vst [vmem:[#allocation4] sm:$0xff] %v501
        %613 = vst [vmem:[#allocation4 + $0x8] sm:$0xff] %v503
        %614 = vst [vmem:[#allocation4 + $0x10] sm:$0xff] %v590
        %615 = vst [vmem:[#allocation4 + $0x18] sm:$0xff] %v592
        %616 = vst [vmem:[#allocation4 + $0x20] sm:$0xff] %v507
        %617 = vst [vmem:[#allocation4 + $0x28] sm:$0xff] %v509
        %618 = vst [vmem:[#allocation4 + $0x30] sm:$0xff] %v596
        %619 = vst [vmem:[#allocation4 + $0x38] sm:$0xff] %v598
        %620 = vst [vmem:[#allocation4 + $0x40] sm:$0xff] %v513
        %621 = vst [vmem:[#allocation4 + $0x48] sm:$0xff] %v515
        %622 = vst [vmem:[#allocation4 + $0x50] sm:$0xff] %v602
        %623 = vst [vmem:[#allocation4 + $0x58] sm:$0xff] %v604
        %624 = vst [vmem:[#allocation4 + $0x60] sm:$0xff] %v519
        %625 = vst [vmem:[#allocation4 + $0x68] sm:$0xff] %v521
        %626 = vst [vmem:[#allocation4 + $0x70] sm:$0xff] %v608
        %627 = vst [vmem:[#allocation4 + $0x78] sm:$0xff] %v610
        %v628 = vld [vmem:[#allocation2] sm:$0xff]
        %v629 = vld [vmem:[#allocation3] sm:$0xff]
        %v630 = vld [vmem:[#allocation4] sm:$0xff]
        %v631 = vld [vmem:[#allocation4 + $0x8] sm:$0xff]
        %v632 = vld [vmem:[#allocation4 + $0x10] sm:$0xff]
        %v633 = vld [vmem:[#allocation4 + $0x18] sm:$0xff]
        %v634 = vld [vmem:[#allocation6] sm:$0xff]
        %v635 = vld [vmem:[#allocation6 + $0x8] sm:$0xff]
        %v636 = vld [vmem:[#allocation6 + $0x10] sm:$0xff]
        %v637 = vld [vmem:[#allocation6 + $0x18] sm:$0xff]
        %v638 = vld [vmem:[#allocation6 + $0x20] sm:$0xff]
        %v639 = vld [vmem:[#allocation6 + $0x28] sm:$0xff]
        %v640 = vld [vmem:[#allocation6 + $0x30] sm:$0xff]
        %v641 = vld [vmem:[#allocation6 + $0x38] sm:$0xff]
        %v642 = vld [vmem:[#allocation6 + $0x40] sm:$0xff]
        %v643 = vld [vmem:[#allocation6 + $0x48] sm:$0xff]
        %v644 = vld [vmem:[#allocation6 + $0x50] sm:$0xff]
        %v645 = vld [vmem:[#allocation6 + $0x58] sm:$0xff]
        %v646 = vld [vmem:[#allocation6 + $0x60] sm:$0xff]
        %v647 = vld [vmem:[#allocation6 + $0x68] sm:$0xff]
        %v648 = vld [vmem:[#allocation6 + $0x70] sm:$0xff]
        %v649 = vld [vmem:[#allocation6 + $0x78] sm:$0xff]
        %v650 = vld [vmem:[#allocation6 + $0x80] sm:$0xff]
        %v651 = vld [vmem:[#allocation6 + $0x88] sm:$0xff]
        %v652 = vld [vmem:[#allocation6 + $0x90] sm:$0xff]
        %v653 = vld [vmem:[#allocation6 + $0x98] sm:$0xff]
        %v654 = vld [vmem:[#allocation6 + $0xa0] sm:$0xff]
        %v655 = vld [vmem:[#allocation6 + $0xa8] sm:$0xff]
        %v656 = vld [vmem:[#allocation6 + $0xb0] sm:$0xff]
        %v657 = vld [vmem:[#allocation6 + $0xb8] sm:$0xff]
        %v658 = vld [vmem:[#allocation6 + $0xc0] sm:$0xff]
        %v659 = vld [vmem:[#allocation6 + $0xc8] sm:$0xff]
        %v660 = vld [vmem:[#allocation6 + $0xd0] sm:$0xff]
        %v661 = vld [vmem:[#allocation6 + $0xd8] sm:$0xff]
        %v662 = vld [vmem:[#allocation6 + $0xe0] sm:$0xff]
        %v663 = vld [vmem:[#allocation6 + $0xe8] sm:$0xff]
        %v664 = vld [vmem:[#allocation6 + $0xf0] sm:$0xff]
        %v665 = vld [vmem:[#allocation6 + $0xf8] sm:$0xff]
        %v666 = vld [vmem:[#allocation6 + $0x100] sm:$0xff]
        %v667 = vld [vmem:[#allocation6 + $0x108] sm:$0xff]
        %v668 = vld [vmem:[#allocation6 + $0x110] sm:$0xff]
        %v669 = vld [vmem:[#allocation6 + $0x118] sm:$0xff]
        %v670 = vld [vmem:[#allocation6 + $0x120] sm:$0xff]
        %v671 = vld [vmem:[#allocation6 + $0x128] sm:$0xff]
        %v672 = vld [vmem:[#allocation6 + $0x130] sm:$0xff]
        %v673 = vld [vmem:[#allocation6 + $0x138] sm:$0xff]
        %v674 = vld [vmem:[#allocation6 + $0x140] sm:$0xff]
        %v675 = vld [vmem:[#allocation6 + $0x148] sm:$0xff]
        %v676 = vld [vmem:[#allocation6 + $0x150] sm:$0xff]
        %v677 = vld [vmem:[#allocation6 + $0x158] sm:$0xff]
        %v678 = vld [vmem:[#allocation6 + $0x160] sm:$0xff]
        %v679 = vld [vmem:[#allocation6 + $0x168] sm:$0xff]
        %v680 = vld [vmem:[#allocation6 + $0x170] sm:$0xff]
        %v681 = vld [vmem:[#allocation6 + $0x178] sm:$0xff]
        %v682 = vld [vmem:[#allocation6 + $0x180] sm:$0xff]
        %v683 = vld [vmem:[#allocation6 + $0x188] sm:$0xff]
        %v684 = vld [vmem:[#allocation6 + $0x190] sm:$0xff]
        %v685 = vld [vmem:[#allocation6 + $0x198] sm:$0xff]
        %v686 = vld [vmem:[#allocation6 + $0x1a0] sm:$0xff]
        %v687 = vld [vmem:[#allocation6 + $0x1a8] sm:$0xff]
        %v688 = vld [vmem:[#allocation6 + $0x1b0] sm:$0xff]
        %v689 = vld [vmem:[#allocation6 + $0x1b8] sm:$0xff]
        %v690 = vld [vmem:[#allocation6 + $0x1c0] sm:$0xff]
        %v691 = vld [vmem:[#allocation6 + $0x1c8] sm:$0xff]
        %v692 = vld [vmem:[#allocation6 + $0x1d0] sm:$0xff]
        %v693 = vld [vmem:[#allocation6 + $0x1d8] sm:$0xff]
        %v694 = vld [vmem:[#allocation6 + $0x1e0] sm:$0xff]
        %v695 = vld [vmem:[#allocation6 + $0x1e8] sm:$0xff]
        %v696 = vld [vmem:[#allocation6 + $0x1f0] sm:$0xff]
        %v697 = vld [vmem:[#allocation6 + $0x1f8] sm:$0xff]
        %698 = vmatprep.subr.mxu0 %v635
        %699 = vmatpush1.msra.mxu0 %v634
        %700 = vmatprep.subr.mxu0 %v639
        %701 = vmatpush1.msra.mxu0 %v638
        %702 = vmatprep.subr.mxu0 %v643
        %703 = vmatpush1.msra.mxu0 %v642
        %704 = vmatprep.subr.mxu0 %v647
        %705 = vmatpush1.msra.mxu0 %v646
        %706 = vmatprep.subr.mxu0 %v651
        %707 = vmatpush1.msra.mxu0 %v650
        %708 = vmatprep.subr.mxu0 %v655
        %709 = vmatpush1.msra.mxu0 %v654
        %710 = vmatprep.subr.mxu0 %v659
        %711 = vmatpush1.msra.mxu0 %v658
        %712 = vmatprep.subr.mxu0 %v663
        %713 = vmatpush1.msra.mxu0 %v662
        %714 = vmatprep.subr.mxu0 %v667
        %715 = vmatpush1.msra.mxu0 %v666
        %716 = vmatprep.subr.mxu0 %v671
        %717 = vmatpush1.msra.mxu0 %v670
        %718 = vmatprep.subr.mxu0 %v675
        %719 = vmatpush1.msra.mxu0 %v674
        %720 = vmatprep.subr.mxu0 %v679
        %721 = vmatpush1.msra.mxu0 %v678
        %722 = vmatprep.subr.mxu0 %v683
        %723 = vmatpush1.msra.mxu0 %v682
        %724 = vmatprep.subr.mxu0 %v687
        %725 = vmatpush1.msra.mxu0 %v686
        %726 = vmatprep.subr.mxu0 %v691
        %727 = vmatpush1.msra.mxu0 %v690
        %728 = vmatprep.subr.mxu0 %v695
        %729 = vmatpush1.msra.mxu0 %v694
        %730 = vmatprep.subr.mxu0 0.0
        %731 = vmatpush1.msra.mxu0 0.0
        %732 = vmatprep.subr.mxu0 0.0
        %733 = vmatpush1.msra.mxu0 0.0
        %734 = vmatprep.subr.mxu0 0.0
        %735 = vmatpush1.msra.mxu0 0.0
        %736 = vmatprep.subr.mxu0 0.0
        %737 = vmatpush1.msra.mxu0 0.0
        %738 = vmatprep.subr.mxu0 0.0
        %739 = vmatpush1.msra.mxu0 0.0
        %740 = vmatprep.subr.mxu0 0.0
        %741 = vmatpush1.msra.mxu0 0.0
        %742 = vmatprep.subr.mxu0 0.0
        %743 = vmatpush1.msra.mxu0 0.0
        %744 = vmatprep.subr.mxu0 0.0
        %745 = vmatpush1.msra.mxu0 0.0
        %746 = vmatprep.subr.mxu0 0.0
        %747 = vmatpush1.msra.mxu0 0.0
        %748 = vmatprep.subr.mxu0 0.0
        %749 = vmatpush1.msra.mxu0 0.0
        %750 = vmatprep.subr.mxu0 0.0
        %751 = vmatpush1.msra.mxu0 0.0
        %752 = vmatprep.subr.mxu0 0.0
        %753 = vmatpush1.msra.mxu0 0.0
        %754 = vmatprep.subr.mxu0 0.0
        %755 = vmatpush1.msra.mxu0 0.0
        %756 = vmatprep.subr.mxu0 0.0
        %757 = vmatpush1.msra.mxu0 0.0
        %758 = vmatprep.subr.mxu0 0.0
        %759 = vmatpush1.msra.mxu0 0.0
        %760 = vmatprep.subr.mxu0 0.0
        %761 = vmatpush1.msra.mxu0 0.0
        %762 = vmatprep.mubr.f32.mxu0 0.0
        %763 = vmatmul.mubr.f32.gmra.mrb[0].mxu0 %v628
        %v764 = vpop.f32.mrb[0].mxu0
        %v765 = vadd.f32 0.0, %v764
        %v766 = vpop.f32.mrb[0].mxu0
        %v767 = vadd.f32 0.0, %v766
        %768 = vdwg.mxu0
        %769 = vmatprep.subr.mxu0 %v637
        %770 = vmatpush1.msra.mxu0 %v636
        %771 = vmatprep.subr.mxu0 %v641
        %772 = vmatpush1.msra.mxu0 %v640
        %773 = vmatprep.subr.mxu0 %v645
        %774 = vmatpush1.msra.mxu0 %v644
        %775 = vmatprep.subr.mxu0 %v649
        %776 = vmatpush1.msra.mxu0 %v648
        %777 = vmatprep.subr.mxu0 %v653
        %778 = vmatpush1.msra.mxu0 %v652
        %779 = vmatprep.subr.mxu0 %v657
        %780 = vmatpush1.msra.mxu0 %v656
        %781 = vmatprep.subr.mxu0 %v661
        %782 = vmatpush1.msra.mxu0 %v660
        %783 = vmatprep.subr.mxu0 %v665
        %784 = vmatpush1.msra.mxu0 %v664
        %785 = vmatprep.subr.mxu0 %v669
        %786 = vmatpush1.msra.mxu0 %v668
        %787 = vmatprep.subr.mxu0 %v673
        %788 = vmatpush1.msra.mxu0 %v672
        %789 = vmatprep.subr.mxu0 %v677
        %790 = vmatpush1.msra.mxu0 %v676
        %791 = vmatprep.subr.mxu0 %v681
        %792 = vmatpush1.msra.mxu0 %v680
        %793 = vmatprep.subr.mxu0 %v685
        %794 = vmatpush1.msra.mxu0 %v684
        %795 = vmatprep.subr.mxu0 %v689
        %796 = vmatpush1.msra.mxu0 %v688
        %797 = vmatprep.subr.mxu0 %v693
        %798 = vmatpush1.msra.mxu0 %v692
        %799 = vmatprep.subr.mxu0 %v697
        %800 = vmatpush1.msra.mxu0 %v696
        %801 = vmatprep.subr.mxu0 0.0
        %802 = vmatpush1.msra.mxu0 0.0
        %803 = vmatprep.subr.mxu0 0.0
        %804 = vmatpush1.msra.mxu0 0.0
        %805 = vmatprep.subr.mxu0 0.0
        %806 = vmatpush1.msra.mxu0 0.0
        %807 = vmatprep.subr.mxu0 0.0
        %808 = vmatpush1.msra.mxu0 0.0
        %809 = vmatprep.subr.mxu0 0.0
        %810 = vmatpush1.msra.mxu0 0.0
        %811 = vmatprep.subr.mxu0 0.0
        %812 = vmatpush1.msra.mxu0 0.0
        %813 = vmatprep.subr.mxu0 0.0
        %814 = vmatpush1.msra.mxu0 0.0
        %815 = vmatprep.subr.mxu0 0.0
        %816 = vmatpush1.msra.mxu0 0.0
        %817 = vmatprep.subr.mxu0 0.0
        %818 = vmatpush1.msra.mxu0 0.0
        %819 = vmatprep.subr.mxu0 0.0
        %820 = vmatpush1.msra.mxu0 0.0
        %821 = vmatprep.subr.mxu0 0.0
        %822 = vmatpush1.msra.mxu0 0.0
        %823 = vmatprep.subr.mxu0 0.0
        %824 = vmatpush1.msra.mxu0 0.0
        %825 = vmatprep.subr.mxu0 0.0
        %826 = vmatpush1.msra.mxu0 0.0
        %827 = vmatprep.subr.mxu0 0.0
        %828 = vmatpush1.msra.mxu0 0.0
        %829 = vmatprep.subr.mxu0 0.0
        %830 = vmatpush1.msra.mxu0 0.0
        %831 = vmatprep.subr.mxu0 0.0
        %832 = vmatpush1.msra.mxu0 0.0
        %833 = vmatprep.mubr.f32.mxu0 0.0
        %834 = vmatmul.mubr.f32.gmra.mrb[0].mxu0 %v628
        %v835 = vpop.f32.mrb[0].mxu0
        %v836 = vadd.f32 0.0, %v835
        %v837 = vpop.f32.mrb[0].mxu0
        %v838 = vadd.f32 0.0, %v837
        %839 = vdwg.mxu0
        %v840 = vadd.f32 %v630, %v765
        %v841 = vadd.f32 %v631, %v767
        %v842 = vadd.f32 %v632, %v836
        %v843 = vadd.f32 %v633, %v838
        %v844 = vmul.f32 %v840, 0.5
        %v845 = vtanh.pop %v844
        %v846 = vadd.f32 %v845, 1.0
        %v847 = vmul.f32 %v846, 0.5
        %v848 = vmul.f32 %v841, 0.5
        %v849 = vtanh.pop %v848
        %v850 = vadd.f32 %v849, 1.0
        %v851 = vmul.f32 %v850, 0.5
        %v852 = vtanh.pop %v842
        %v853 = vmul.f32 %v843, 0.5
        %v854 = vtanh.pop %v853
        %v855 = vadd.f32 %v854, 1.0
        %v856 = vmul.f32 %v855, 0.5
        %v857 = vmul.f32 %v851, %v629
        %v858 = vmul.f32 %v847, %v852
        %v859 = vadd.f32 %v857, %v858
        %v860 = vtanh.pop %v859
        %v861 = vmul.f32 %v856, %v860
        %862 = vst [vmem:[#allocation2] sm:$0xff] %v861
        %863 = vst [vmem:[#allocation3] sm:$0xff] %v859
        %864 = vst [vmem:[%s355] sm:$0xff] %v861
        %v865 = vld [vmem:[#allocation2] sm:$0xff]
        %v866 = vld [vmem:[#allocation3] sm:$0xff]
        %s867 = scalar_lea.vmem [#allocation4], 32
        %v868 = vld [vmem:[%s867] sm:$0xff]
        %v869 = vld [vmem:[%s867 + $0x8] sm:$0xff]
        %v870 = vld [vmem:[%s867 + $0x10] sm:$0xff]
        %v871 = vld [vmem:[%s867 + $0x18] sm:$0xff]
        %v872 = vld [vmem:[#allocation6] sm:$0xff]
        %v873 = vld [vmem:[#allocation6 + $0x8] sm:$0xff]
        %v874 = vld [vmem:[#allocation6 + $0x10] sm:$0xff]
        %v875 = vld [vmem:[#allocation6 + $0x18] sm:$0xff]
        %v876 = vld [vmem:[#allocation6 + $0x20] sm:$0xff]
        %v877 = vld [vmem:[#allocation6 + $0x28] sm:$0xff]
        %v878 = vld [vmem:[#allocation6 + $0x30] sm:$0xff]
        %v879 = vld [vmem:[#allocation6 + $0x38] sm:$0xff]
        %v880 = vld [vmem:[#allocation6 + $0x40] sm:$0xff]
        %v881 = vld [vmem:[#allocation6 + $0x48] sm:$0xff]
        %v882 = vld [vmem:[#allocation6 + $0x50] sm:$0xff]
        %v883 = vld [vmem:[#allocation6 + $0x58] sm:$0xff]
        %v884 = vld [vmem:[#allocation6 + $0x60] sm:$0xff]
        %v885 = vld [vmem:[#allocation6 + $0x68] sm:$0xff]
        %v886 = vld [vmem:[#allocation6 + $0x70] sm:$0xff]
        %v887 = vld [vmem:[#allocation6 + $0x78] sm:$0xff]
        %v888 = vld [vmem:[#allocation6 + $0x80] sm:$0xff]
        %v889 = vld [vmem:[#allocation6 + $0x88] sm:$0xff]
        %v890 = vld [vmem:[#allocation6 + $0x90] sm:$0xff]
        %v891 = vld [vmem:[#allocation6 + $0x98] sm:$0xff]
        %v892 = vld [vmem:[#allocation6 + $0xa0] sm:$0xff]
        %v893 = vld [vmem:[#allocation6 + $0xa8] sm:$0xff]
        %v894 = vld [vmem:[#allocation6 + $0xb0] sm:$0xff]
        %v895 = vld [vmem:[#allocation6 + $0xb8] sm:$0xff]
        %v896 = vld [vmem:[#allocation6 + $0xc0] sm:$0xff]
        %v897 = vld [vmem:[#allocation6 + $0xc8] sm:$0xff]
        %v898 = vld [vmem:[#allocation6 + $0xd0] sm:$0xff]
        %v899 = vld [vmem:[#allocation6 + $0xd8] sm:$0xff]
        %v900 = vld [vmem:[#allocation6 + $0xe0] sm:$0xff]
        %v901 = vld [vmem:[#allocation6 + $0xe8] sm:$0xff]
        %v902 = vld [vmem:[#allocation6 + $0xf0] sm:$0xff]
        %v903 = vld [vmem:[#allocation6 + $0xf8] sm:$0xff]
        %v904 = vld [vmem:[#allocation6 + $0x100] sm:$0xff]
        %v905 = vld [vmem:[#allocation6 + $0x108] sm:$0xff]
        %v906 = vld [vmem:[#allocation6 + $0x110] sm:$0xff]
        %v907 = vld [vmem:[#allocation6 + $0x118] sm:$0xff]
        %v908 = vld [vmem:[#allocation6 + $0x120] sm:$0xff]
        %v909 = vld [vmem:[#allocation6 + $0x128] sm:$0xff]
        %v910 = vld [vmem:[#allocation6 + $0x130] sm:$0xff]
        %v911 = vld [vmem:[#allocation6 + $0x138] sm:$0xff]
        %v912 = vld [vmem:[#allocation6 + $0x140] sm:$0xff]
        %v913 = vld [vmem:[#allocation6 + $0x148] sm:$0xff]
        %v914 = vld [vmem:[#allocation6 + $0x150] sm:$0xff]
        %v915 = vld [vmem:[#allocation6 + $0x158] sm:$0xff]
        %v916 = vld [vmem:[#allocation6 + $0x160] sm:$0xff]
        %v917 = vld [vmem:[#allocation6 + $0x168] sm:$0xff]
        %v918 = vld [vmem:[#allocation6 + $0x170] sm:$0xff]
        %v919 = vld [vmem:[#allocation6 + $0x178] sm:$0xff]
        %v920 = vld [vmem:[#allocation6 + $0x180] sm:$0xff]
        %v921 = vld [vmem:[#allocation6 + $0x188] sm:$0xff]
        %v922 = vld [vmem:[#allocation6 + $0x190] sm:$0xff]
        %v923 = vld [vmem:[#allocation6 + $0x198] sm:$0xff]
        %v924 = vld [vmem:[#allocation6 + $0x1a0] sm:$0xff]
        %v925 = vld [vmem:[#allocation6 + $0x1a8] sm:$0xff]
        %v926 = vld [vmem:[#allocation6 + $0x1b0] sm:$0xff]
        %v927 = vld [vmem:[#allocation6 + $0x1b8] sm:$0xff]
        %v928 = vld [vmem:[#allocation6 + $0x1c0] sm:$0xff]
        %v929 = vld [vmem:[#allocation6 + $0x1c8] sm:$0xff]
        %v930 = vld [vmem:[#allocation6 + $0x1d0] sm:$0xff]
        %v931 = vld [vmem:[#allocation6 + $0x1d8] sm:$0xff]
        %v932 = vld [vmem:[#allocation6 + $0x1e0] sm:$0xff]
        %v933 = vld [vmem:[#allocation6 + $0x1e8] sm:$0xff]
        %v934 = vld [vmem:[#allocation6 + $0x1f0] sm:$0xff]
        %v935 = vld [vmem:[#allocation6 + $0x1f8] sm:$0xff]
        %936 = vmatprep.subr.mxu0 %v873
        %937 = vmatpush1.msra.mxu0 %v872
        %938 = vmatprep.subr.mxu0 %v877
        %939 = vmatpush1.msra.mxu0 %v876
        %940 = vmatprep.subr.mxu0 %v881
        %941 = vmatpush1.msra.mxu0 %v880
        %942 = vmatprep.subr.mxu0 %v885
        %943 = vmatpush1.msra.mxu0 %v884
        %944 = vmatprep.subr.mxu0 %v889
        %945 = vmatpush1.msra.mxu0 %v888
        %946 = vmatprep.subr.mxu0 %v893
        %947 = vmatpush1.msra.mxu0 %v892
        %948 = vmatprep.subr.mxu0 %v897
        %949 = vmatpush1.msra.mxu0 %v896
        %950 = vmatprep.subr.mxu0 %v901
        %951 = vmatpush1.msra.mxu0 %v900
        %952 = vmatprep.subr.mxu0 %v905
        %953 = vmatpush1.msra.mxu0 %v904
        %954 = vmatprep.subr.mxu0 %v909
        %955 = vmatpush1.msra.mxu0 %v908
        %956 = vmatprep.subr.mxu0 %v913
        %957 = vmatpush1.msra.mxu0 %v912
        %958 = vmatprep.subr.mxu0 %v917
        %959 = vmatpush1.msra.mxu0 %v916
        %960 = vmatprep.subr.mxu0 %v921
        %961 = vmatpush1.msra.mxu0 %v920
        %962 = vmatprep.subr.mxu0 %v925
        %963 = vmatpush1.msra.mxu0 %v924
        %964 = vmatprep.subr.mxu0 %v929
        %965 = vmatpush1.msra.mxu0 %v928
        %966 = vmatprep.subr.mxu0 %v933
        %967 = vmatpush1.msra.mxu0 %v932
        %968 = vmatprep.subr.mxu0 0.0
        %969 = vmatpush1.msra.mxu0 0.0
        %970 = vmatprep.subr.mxu0 0.0
        %971 = vmatpush1.msra.mxu0 0.0
        %972 = vmatprep.subr.mxu0 0.0
        %973 = vmatpush1.msra.mxu0 0.0
        %974 = vmatprep.subr.mxu0 0.0
        %975 = vmatpush1.msra.mxu0 0.0
        %976 = vmatprep.subr.mxu0 0.0
        %977 = vmatpush1.msra.mxu0 0.0
        %978 = vmatprep.subr.mxu0 0.0
        %979 = vmatpush1.msra.mxu0 0.0
        %980 = vmatprep.subr.mxu0 0.0
        %981 = vmatpush1.msra.mxu0 0.0
        %982 = vmatprep.subr.mxu0 0.0
        %983 = vmatpush1.msra.mxu0 0.0
        %984 = vmatprep.subr.mxu0 0.0
        %985 = vmatpush1.msra.mxu0 0.0
        %986 = vmatprep.subr.mxu0 0.0
        %987 = vmatpush1.msra.mxu0 0.0
        %988 = vmatprep.subr.mxu0 0.0
        %989 = vmatpush1.msra.mxu0 0.0
        %990 = vmatprep.subr.mxu0 0.0
        %991 = vmatpush1.msra.mxu0 0.0
        %992 = vmatprep.subr.mxu0 0.0
        %993 = vmatpush1.msra.mxu0 0.0
        %994 = vmatprep.subr.mxu0 0.0
        %995 = vmatpush1.msra.mxu0 0.0
        %996 = vmatprep.subr.mxu0 0.0
        %997 = vmatpush1.msra.mxu0 0.0
        %998 = vmatprep.subr.mxu0 0.0
        %999 = vmatpush1.msra.mxu0 0.0
        %1000 = vmatprep.mubr.f32.mxu0 0.0
        %1001 = vmatmul.mubr.f32.gmra.mrb[0].mxu0 %v865
        %v1002 = vpop.f32.mrb[0].mxu0
        %v1003 = vadd.f32 0.0, %v1002
        %v1004 = vpop.f32.mrb[0].mxu0
        %v1005 = vadd.f32 0.0, %v1004
        %1006 = vdwg.mxu0
        %1007 = vmatprep.subr.mxu0 %v875
        %1008 = vmatpush1.msra.mxu0 %v874
        %1009 = vmatprep.subr.mxu0 %v879
        %1010 = vmatpush1.msra.mxu0 %v878
        %1011 = vmatprep.subr.mxu0 %v883
        %1012 = vmatpush1.msra.mxu0 %v882
        %1013 = vmatprep.subr.mxu0 %v887
        %1014 = vmatpush1.msra.mxu0 %v886
        %1015 = vmatprep.subr.mxu0 %v891
        %1016 = vmatpush1.msra.mxu0 %v890
        %1017 = vmatprep.subr.mxu0 %v895
        %1018 = vmatpush1.msra.mxu0 %v894
        %1019 = vmatprep.subr.mxu0 %v899
        %1020 = vmatpush1.msra.mxu0 %v898
        %1021 = vmatprep.subr.mxu0 %v903
        %1022 = vmatpush1.msra.mxu0 %v902
        %1023 = vmatprep.subr.mxu0 %v907
        %1024 = vmatpush1.msra.mxu0 %v906
        %1025 = vmatprep.subr.mxu0 %v911
        %1026 = vmatpush1.msra.mxu0 %v910
        %1027 = vmatprep.subr.mxu0 %v915
        %1028 = vmatpush1.msra.mxu0 %v914
        %1029 = vmatprep.subr.mxu0 %v919
        %1030 = vmatpush1.msra.mxu0 %v918
        %1031 = vmatprep.subr.mxu0 %v923
        %1032 = vmatpush1.msra.mxu0 %v922
        %1033 = vmatprep.subr.mxu0 %v927
        %1034 = vmatpush1.msra.mxu0 %v926
        %1035 = vmatprep.subr.mxu0 %v931
        %1036 = vmatpush1.msra.mxu0 %v930
        %1037 = vmatprep.subr.mxu0 %v935
        %1038 = vmatpush1.msra.mxu0 %v934
        %1039 = vmatprep.subr.mxu0 0.0
        %1040 = vmatpush1.msra.mxu0 0.0
        %1041 = vmatprep.subr.mxu0 0.0
        %1042 = vmatpush1.msra.mxu0 0.0
        %1043 = vmatprep.subr.mxu0 0.0
        %1044 = vmatpush1.msra.mxu0 0.0
        %1045 = vmatprep.subr.mxu0 0.0
        %1046 = vmatpush1.msra.mxu0 0.0
        %1047 = vmatprep.subr.mxu0 0.0
        %1048 = vmatpush1.msra.mxu0 0.0
        %1049 = vmatprep.subr.mxu0 0.0
        %1050 = vmatpush1.msra.mxu0 0.0
        %1051 = vmatprep.subr.mxu0 0.0
        %1052 = vmatpush1.msra.mxu0 0.0
        %1053 = vmatprep.subr.mxu0 0.0
        %1054 = vmatpush1.msra.mxu0 0.0
        %1055 = vmatprep.subr.mxu0 0.0
        %1056 = vmatpush1.msra.mxu0 0.0
        %1057 = vmatprep.subr.mxu0 0.0
        %1058 = vmatpush1.msra.mxu0 0.0
        %1059 = vmatprep.subr.mxu0 0.0
        %1060 = vmatpush1.msra.mxu0 0.0
        %1061 = vmatprep.subr.mxu0 0.0
        %1062 = vmatpush1.msra.mxu0 0.0
        %1063 = vmatprep.subr.mxu0 0.0
        %1064 = vmatpush1.msra.mxu0 0.0
        %1065 = vmatprep.subr.mxu0 0.0
        %1066 = vmatpush1.msra.mxu0 0.0
        %1067 = vmatprep.subr.mxu0 0.0
        %1068 = vmatpush1.msra.mxu0 0.0
        %1069 = vmatprep.subr.mxu0 0.0
        %1070 = vmatpush1.msra.mxu0 0.0
        %1071 = vmatprep.mubr.f32.mxu0 0.0
        %1072 = vmatmul.mubr.f32.gmra.mrb[0].mxu0 %v865
        %v1073 = vpop.f32.mrb[0].mxu0
        %v1074 = vadd.f32 0.0, %v1073
        %v1075 = vpop.f32.mrb[0].mxu0
        %v1076 = vadd.f32 0.0, %v1075
        %1077 = vdwg.mxu0
        %v1078 = vadd.f32 %v868, %v1003
        %v1079 = vadd.f32 %v869, %v1005
        %v1080 = vadd.f32 %v870, %v1074
        %v1081 = vadd.f32 %v871, %v1076
        %v1082 = vmul.f32 %v1078, 0.5
        %v1083 = vtanh.pop %v1082
        %v1084 = vadd.f32 %v1083, 1.0
        %v1085 = vmul.f32 %v1084, 0.5
        %v1086 = vmul.f32 %v1079, 0.5
        %v1087 = vtanh.pop %v1086
        %v1088 = vadd.f32 %v1087, 1.0
        %v1089 = vmul.f32 %v1088, 0.5
        %v1090 = vtanh.pop %v1080
        %v1091 = vmul.f32 %v1081, 0.5
        %v1092 = vtanh.pop %v1091
        %v1093 = vadd.f32 %v1092, 1.0
        %v1094 = vmul.f32 %v1093, 0.5
        %v1095 = vmul.f32 %v1089, %v866
        %v1096 = vmul.f32 %v1085, %v1090
        %v1097 = vadd.f32 %v1095, %v1096
        %v1098 = vtanh.pop %v1097
        %v1099 = vmul.f32 %v1094, %v1098
        %1100 = vst [vmem:[#allocation2] sm:$0xff] %v1099
        %1101 = vst [vmem:[#allocation3] sm:$0xff] %v1097
        %s1102 = scalar_lea.vmem %s355, 8 [#allocation9]
        %1103 = vst [vmem:[%s1102] sm:$0xff] %v1099
        %v1104 = vld [vmem:[#allocation2] sm:$0xff]
        %v1105 = vld [vmem:[#allocation3] sm:$0xff]
        %s1106 = scalar_lea.vmem [#allocation4], 64
        %v1107 = vld [vmem:[%s1106] sm:$0xff]
        %v1108 = vld [vmem:[%s1106 + $0x8] sm:$0xff]
        %v1109 = vld [vmem:[%s1106 + $0x10] sm:$0xff]
        %v1110 = vld [vmem:[%s1106 + $0x18] sm:$0xff]
        %v1111 = vld [vmem:[#allocation6] sm:$0xff]
        %v1112 = vld [vmem:[#allocation6 + $0x8] sm:$0xff]
        %v1113 = vld [vmem:[#allocation6 + $0x10] sm:$0xff]
        %v1114 = vld [vmem:[#allocation6 + $0x18] sm:$0xff]
        %v1115 = vld [vmem:[#allocation6 + $0x20] sm:$0xff]
        %v1116 = vld [vmem:[#allocation6 + $0x28] sm:$0xff]
        %v1117 = vld [vmem:[#allocation6 + $0x30] sm:$0xff]
        %v1118 = vld [vmem:[#allocation6 + $0x38] sm:$0xff]
        %v1119 = vld [vmem:[#allocation6 + $0x40] sm:$0xff]
        %v1120 = vld [vmem:[#allocation6 + $0x48] sm:$0xff]
        %v1121 = vld [vmem:[#allocation6 + $0x50] sm:$0xff]
        %v1122 = vld [vmem:[#allocation6 + $0x58] sm:$0xff]
        %v1123 = vld [vmem:[#allocation6 + $0x60] sm:$0xff]
        %v1124 = vld [vmem:[#allocation6 + $0x68] sm:$0xff]
        %v1125 = vld [vmem:[#allocation6 + $0x70] sm:$0xff]
        %v1126 = vld [vmem:[#allocation6 + $0x78] sm:$0xff]
        %v1127 = vld [vmem:[#allocation6 + $0x80] sm:$0xff]
        %v1128 = vld [vmem:[#allocation6 + $0x88] sm:$0xff]
        %v1129 = vld [vmem:[#allocation6 + $0x90] sm:$0xff]
        %v1130 = vld [vmem:[#allocation6 + $0x98] sm:$0xff]
        %v1131 = vld [vmem:[#allocation6 + $0xa0] sm:$0xff]
        %v1132 = vld [vmem:[#allocation6 + $0xa8] sm:$0xff]
        %v1133 = vld [vmem:[#allocation6 + $0xb0] sm:$0xff]
        %v1134 = vld [vmem:[#allocation6 + $0xb8] sm:$0xff]
        %v1135 = vld [vmem:[#allocation6 + $0xc0] sm:$0xff]
        %v1136 = vld [vmem:[#allocation6 + $0xc8] sm:$0xff]
        %v1137 = vld [vmem:[#allocation6 + $0xd0] sm:$0xff]
        %v1138 = vld [vmem:[#allocation6 + $0xd8] sm:$0xff]
        %v1139 = vld [vmem:[#allocation6 + $0xe0] sm:$0xff]
        %v1140 = vld [vmem:[#allocation6 + $0xe8] sm:$0xff]
        %v1141 = vld [vmem:[#allocation6 + $0xf0] sm:$0xff]
        %v1142 = vld [vmem:[#allocation6 + $0xf8] sm:$0xff]
        %v1143 = vld [vmem:[#allocation6 + $0x100] sm:$0xff]
        %v1144 = vld [vmem:[#allocation6 + $0x108] sm:$0xff]
        %v1145 = vld [vmem:[#allocation6 + $0x110] sm:$0xff]
        %v1146 = vld [vmem:[#allocation6 + $0x118] sm:$0xff]
        %v1147 = vld [vmem:[#allocation6 + $0x120] sm:$0xff]
        %v1148 = vld [vmem:[#allocation6 + $0x128] sm:$0xff]
        %v1149 = vld [vmem:[#allocation6 + $0x130] sm:$0xff]
        %v1150 = vld [vmem:[#allocation6 + $0x138] sm:$0xff]
        %v1151 = vld [vmem:[#allocation6 + $0x140] sm:$0xff]
        %v1152 = vld [vmem:[#allocation6 + $0x148] sm:$0xff]
        %v1153 = vld [vmem:[#allocation6 + $0x150] sm:$0xff]
        %v1154 = vld [vmem:[#allocation6 + $0x158] sm:$0xff]
        %v1155 = vld [vmem:[#allocation6 + $0x160] sm:$0xff]
        %v1156 = vld [vmem:[#allocation6 + $0x168] sm:$0xff]
        %v1157 = vld [vmem:[#allocation6 + $0x170] sm:$0xff]
        %v1158 = vld [vmem:[#allocation6 + $0x178] sm:$0xff]
        %v1159 = vld [vmem:[#allocation6 + $0x180] sm:$0xff]
        %v1160 = vld [vmem:[#allocation6 + $0x188] sm:$0xff]
        %v1161 = vld [vmem:[#allocation6 + $0x190] sm:$0xff]
        %v1162 = vld [vmem:[#allocation6 + $0x198] sm:$0xff]
        %v1163 = vld [vmem:[#allocation6 + $0x1a0] sm:$0xff]
        %v1164 = vld [vmem:[#allocation6 + $0x1a8] sm:$0xff]
        %v1165 = vld [vmem:[#allocation6 + $0x1b0] sm:$0xff]
        %v1166 = vld [vmem:[#allocation6 + $0x1b8] sm:$0xff]
        %v1167 = vld [vmem:[#allocation6 + $0x1c0] sm:$0xff]
        %v1168 = vld [vmem:[#allocation6 + $0x1c8] sm:$0xff]
        %v1169 = vld [vmem:[#allocation6 + $0x1d0] sm:$0xff]
        %v1170 = vld [vmem:[#allocation6 + $0x1d8] sm:$0xff]
        %v1171 = vld [vmem:[#allocation6 + $0x1e0] sm:$0xff]
        %v1172 = vld [vmem:[#allocation6 + $0x1e8] sm:$0xff]
        %v1173 = vld [vmem:[#allocation6 + $0x1f0] sm:$0xff]
        %v1174 = vld [vmem:[#allocation6 + $0x1f8] sm:$0xff]
        %1175 = vmatprep.subr.mxu0 %v1112
        %1176 = vmatpush1.msra.mxu0 %v1111
        %1177 = vmatprep.subr.mxu0 %v1116
        %1178 = vmatpush1.msra.mxu0 %v1115
        %1179 = vmatprep.subr.mxu0 %v1120
        %1180 = vmatpush1.msra.mxu0 %v1119
        %1181 = vmatprep.subr.mxu0 %v1124
        %1182 = vmatpush1.msra.mxu0 %v1123
        %1183 = vmatprep.subr.mxu0 %v1128
        %1184 = vmatpush1.msra.mxu0 %v1127
        %1185 = vmatprep.subr.mxu0 %v1132
        %1186 = vmatpush1.msra.mxu0 %v1131
        %1187 = vmatprep.subr.mxu0 %v1136
        %1188 = vmatpush1.msra.mxu0 %v1135
        %1189 = vmatprep.subr.mxu0 %v1140
        %1190 = vmatpush1.msra.mxu0 %v1139
        %1191 = vmatprep.subr.mxu0 %v1144
        %1192 = vmatpush1.msra.mxu0 %v1143
        %1193 = vmatprep.subr.mxu0 %v1148
        %1194 = vmatpush1.msra.mxu0 %v1147
        %1195 = vmatprep.subr.mxu0 %v1152
        %1196 = vmatpush1.msra.mxu0 %v1151
        %1197 = vmatprep.subr.mxu0 %v1156
        %1198 = vmatpush1.msra.mxu0 %v1155
        %1199 = vmatprep.subr.mxu0 %v1160
        %1200 = vmatpush1.msra.mxu0 %v1159
        %1201 = vmatprep.subr.mxu0 %v1164
        %1202 = vmatpush1.msra.mxu0 %v1163
        %1203 = vmatprep.subr.mxu0 %v1168
        %1204 = vmatpush1.msra.mxu0 %v1167
        %1205 = vmatprep.subr.mxu0 %v1172
        %1206 = vmatpush1.msra.mxu0 %v1171
        %1207 = vmatprep.subr.mxu0 0.0
        %1208 = vmatpush1.msra.mxu0 0.0
        %1209 = vmatprep.subr.mxu0 0.0
        %1210 = vmatpush1.msra.mxu0 0.0
        %1211 = vmatprep.subr.mxu0 0.0
        %1212 = vmatpush1.msra.mxu0 0.0
        %1213 = vmatprep.subr.mxu0 0.0
        %1214 = vmatpush1.msra.mxu0 0.0
        %1215 = vmatprep.subr.mxu0 0.0
        %1216 = vmatpush1.msra.mxu0 0.0
        %1217 = vmatprep.subr.mxu0 0.0
        %1218 = vmatpush1.msra.mxu0 0.0
        %1219 = vmatprep.subr.mxu0 0.0
        %1220 = vmatpush1.msra.mxu0 0.0
        %1221 = vmatprep.subr.mxu0 0.0
        %1222 = vmatpush1.msra.mxu0 0.0
        %1223 = vmatprep.subr.mxu0 0.0
        %1224 = vmatpush1.msra.mxu0 0.0
        %1225 = vmatprep.subr.mxu0 0.0
        %1226 = vmatpush1.msra.mxu0 0.0
        %1227 = vmatprep.subr.mxu0 0.0
        %1228 = vmatpush1.msra.mxu0 0.0
        %1229 = vmatprep.subr.mxu0 0.0
        %1230 = vmatpush1.msra.mxu0 0.0
        %1231 = vmatprep.subr.mxu0 0.0
        %1232 = vmatpush1.msra.mxu0 0.0
        %1233 = vmatprep.subr.mxu0 0.0
        %1234 = vmatpush1.msra.mxu0 0.0
        %1235 = vmatprep.subr.mxu0 0.0
        %1236 = vmatpush1.msra.mxu0 0.0
        %1237 = vmatprep.subr.mxu0 0.0
        %1238 = vmatpush1.msra.mxu0 0.0
        %1239 = vmatprep.mubr.f32.mxu0 0.0
        %1240 = vmatmul.mubr.f32.gmra.mrb[0].mxu0 %v1104
        %v1241 = vpop.f32.mrb[0].mxu0
        %v1242 = vadd.f32 0.0, %v1241
        %v1243 = vpop.f32.mrb[0].mxu0
        %v1244 = vadd.f32 0.0, %v1243
        %1245 = vdwg.mxu0
        %1246 = vmatprep.subr.mxu0 %v1114
        %1247 = vmatpush1.msra.mxu0 %v1113
        %1248 = vmatprep.subr.mxu0 %v1118
        %1249 = vmatpush1.msra.mxu0 %v1117
        %1250 = vmatprep.subr.mxu0 %v1122
        %1251 = vmatpush1.msra.mxu0 %v1121
        %1252 = vmatprep.subr.mxu0 %v1126
        %1253 = vmatpush1.msra.mxu0 %v1125
        %1254 = vmatprep.subr.mxu0 %v1130
        %1255 = vmatpush1.msra.mxu0 %v1129
        %1256 = vmatprep.subr.mxu0 %v1134
        %1257 = vmatpush1.msra.mxu0 %v1133
        %1258 = vmatprep.subr.mxu0 %v1138
        %1259 = vmatpush1.msra.mxu0 %v1137
        %1260 = vmatprep.subr.mxu0 %v1142
        %1261 = vmatpush1.msra.mxu0 %v1141
        %1262 = vmatprep.subr.mxu0 %v1146
        %1263 = vmatpush1.msra.mxu0 %v1145
        %1264 = vmatprep.subr.mxu0 %v1150
        %1265 = vmatpush1.msra.mxu0 %v1149
        %1266 = vmatprep.subr.mxu0 %v1154
        %1267 = vmatpush1.msra.mxu0 %v1153
        %1268 = vmatprep.subr.mxu0 %v1158
        %1269 = vmatpush1.msra.mxu0 %v1157
        %1270 = vmatprep.subr.mxu0 %v1162
        %1271 = vmatpush1.msra.mxu0 %v1161
        %1272 = vmatprep.subr.mxu0 %v1166
        %1273 = vmatpush1.msra.mxu0 %v1165
        %1274 = vmatprep.subr.mxu0 %v1170
        %1275 = vmatpush1.msra.mxu0 %v1169
        %1276 = vmatprep.subr.mxu0 %v1174
        %1277 = vmatpush1.msra.mxu0 %v1173
        %1278 = vmatprep.subr.mxu0 0.0
        %1279 = vmatpush1.msra.mxu0 0.0
        %1280 = vmatprep.subr.mxu0 0.0
        %1281 = vmatpush1.msra.mxu0 0.0
        %1282 = vmatprep.subr.mxu0 0.0
        %1283 = vmatpush1.msra.mxu0 0.0
        %1284 = vmatprep.subr.mxu0 0.0
        %1285 = vmatpush1.msra.mxu0 0.0
        %1286 = vmatprep.subr.mxu0 0.0
        %1287 = vmatpush1.msra.mxu0 0.0
        %1288 = vmatprep.subr.mxu0 0.0
        %1289 = vmatpush1.msra.mxu0 0.0
        %1290 = vmatprep.subr.mxu0 0.0
        %1291 = vmatpush1.msra.mxu0 0.0
        %1292 = vmatprep.subr.mxu0 0.0
        %1293 = vmatpush1.msra.mxu0 0.0
        %1294 = vmatprep.subr.mxu0 0.0
        %1295 = vmatpush1.msra.mxu0 0.0
        %1296 = vmatprep.subr.mxu0 0.0
        %1297 = vmatpush1.msra.mxu0 0.0
        %1298 = vmatprep.subr.mxu0 0.0
        %1299 = vmatpush1.msra.mxu0 0.0
        %1300 = vmatprep.subr.mxu0 0.0
        %1301 = vmatpush1.msra.mxu0 0.0
        %1302 = vmatprep.subr.mxu0 0.0
        %1303 = vmatpush1.msra.mxu0 0.0
        %1304 = vmatprep.subr.mxu0 0.0
        %1305 = vmatpush1.msra.mxu0 0.0
        %1306 = vmatprep.subr.mxu0 0.0
        %1307 = vmatpush1.msra.mxu0 0.0
        %1308 = vmatprep.subr.mxu0 0.0
        %1309 = vmatpush1.msra.mxu0 0.0
        %1310 = vmatprep.mubr.f32.mxu0 0.0
        %1311 = vmatmul.mubr.f32.gmra.mrb[0].mxu0 %v1104
        %v1312 = vpop.f32.mrb[0].mxu0
        %v1313 = vadd.f32 0.0, %v1312
        %v1314 = vpop.f32.mrb[0].mxu0
        %v1315 = vadd.f32 0.0, %v1314
        %1316 = vdwg.mxu0
        %v1317 = vadd.f32 %v1107, %v1242
        %v1318 = vadd.f32 %v1108, %v1244
        %v1319 = vadd.f32 %v1109, %v1313
        %v1320 = vadd.f32 %v1110, %v1315
        %v1321 = vmul.f32 %v1317, 0.5
        %v1322 = vtanh.pop %v1321
        %v1323 = vadd.f32 %v1322, 1.0
        %v1324 = vmul.f32 %v1323, 0.5
        %v1325 = vmul.f32 %v1318, 0.5
        %v1326 = vtanh.pop %v1325
        %v1327 = vadd.f32 %v1326, 1.0
        %v1328 = vmul.f32 %v1327, 0.5
        %v1329 = vtanh.pop %v1319
        %v1330 = vmul.f32 %v1320, 0.5
        %v1331 = vtanh.pop %v1330
        %v1332 = vadd.f32 %v1331, 1.0
        %v1333 = vmul.f32 %v1332, 0.5
        %v1334 = vmul.f32 %v1328, %v1105
        %v1335 = vmul.f32 %v1324, %v1329
        %v1336 = vadd.f32 %v1334, %v1335
        %v1337 = vtanh.pop %v1336
        %v1338 = vmul.f32 %v1333, %v1337
        %1339 = vst [vmem:[#allocation2] sm:$0xff] %v1338
        %1340 = vst [vmem:[#allocation3] sm:$0xff] %v1336
        %s1341 = scalar_lea.vmem %s355, 16 [#allocation9]
        %1342 = vst [vmem:[%s1341] sm:$0xff] %v1338
        %v1343 = vld [vmem:[#allocation2] sm:$0xff]
        %v1344 = vld [vmem:[#allocation3] sm:$0xff]
        %s1345 = scalar_lea.vmem [#allocation4], 96
        %v1346 = vld [vmem:[%s1345] sm:$0xff]
        %v1347 = vld [vmem:[%s1345 + $0x8] sm:$0xff]
        %v1348 = vld [vmem:[%s1345 + $0x10] sm:$0xff]
        %v1349 = vld [vmem:[%s1345 + $0x18] sm:$0xff]
        %v1350 = vld [vmem:[#allocation6] sm:$0xff]
        %v1351 = vld [vmem:[#allocation6 + $0x8] sm:$0xff]
        %v1352 = vld [vmem:[#allocation6 + $0x10] sm:$0xff]
        %v1353 = vld [vmem:[#allocation6 + $0x18] sm:$0xff]
        %v1354 = vld [vmem:[#allocation6 + $0x20] sm:$0xff]
        %v1355 = vld [vmem:[#allocation6 + $0x28] sm:$0xff]
        %v1356 = vld [vmem:[#allocation6 + $0x30] sm:$0xff]
        %v1357 = vld [vmem:[#allocation6 + $0x38] sm:$0xff]
        %v1358 = vld [vmem:[#allocation6 + $0x40] sm:$0xff]
        %v1359 = vld [vmem:[#allocation6 + $0x48] sm:$0xff]
        %v1360 = vld [vmem:[#allocation6 + $0x50] sm:$0xff]
        %v1361 = vld [vmem:[#allocation6 + $0x58] sm:$0xff]
        %v1362 = vld [vmem:[#allocation6 + $0x60] sm:$0xff]
        %v1363 = vld [vmem:[#allocation6 + $0x68] sm:$0xff]
        %v1364 = vld [vmem:[#allocation6 + $0x70] sm:$0xff]
        %v1365 = vld [vmem:[#allocation6 + $0x78] sm:$0xff]
        %v1366 = vld [vmem:[#allocation6 + $0x80] sm:$0xff]
        %v1367 = vld [vmem:[#allocation6 + $0x88] sm:$0xff]
        %v1368 = vld [vmem:[#allocation6 + $0x90] sm:$0xff]
        %v1369 = vld [vmem:[#allocation6 + $0x98] sm:$0xff]
        %v1370 = vld [vmem:[#allocation6 + $0xa0] sm:$0xff]
        %v1371 = vld [vmem:[#allocation6 + $0xa8] sm:$0xff]
        %v1372 = vld [vmem:[#allocation6 + $0xb0] sm:$0xff]
        %v1373 = vld [vmem:[#allocation6 + $0xb8] sm:$0xff]
        %v1374 = vld [vmem:[#allocation6 + $0xc0] sm:$0xff]
        %v1375 = vld [vmem:[#allocation6 + $0xc8] sm:$0xff]
        %v1376 = vld [vmem:[#allocation6 + $0xd0] sm:$0xff]
        %v1377 = vld [vmem:[#allocation6 + $0xd8] sm:$0xff]
        %v1378 = vld [vmem:[#allocation6 + $0xe0] sm:$0xff]
        %v1379 = vld [vmem:[#allocation6 + $0xe8] sm:$0xff]
        %v1380 = vld [vmem:[#allocation6 + $0xf0] sm:$0xff]
        %v1381 = vld [vmem:[#allocation6 + $0xf8] sm:$0xff]
        %v1382 = vld [vmem:[#allocation6 + $0x100] sm:$0xff]
        %v1383 = vld [vmem:[#allocation6 + $0x108] sm:$0xff]
        %v1384 = vld [vmem:[#allocation6 + $0x110] sm:$0xff]
        %v1385 = vld [vmem:[#allocation6 + $0x118] sm:$0xff]
        %v1386 = vld [vmem:[#allocation6 + $0x120] sm:$0xff]
        %v1387 = vld [vmem:[#allocation6 + $0x128] sm:$0xff]
        %v1388 = vld [vmem:[#allocation6 + $0x130] sm:$0xff]
        %v1389 = vld [vmem:[#allocation6 + $0x138] sm:$0xff]
        %v1390 = vld [vmem:[#allocation6 + $0x140] sm:$0xff]
        %v1391 = vld [vmem:[#allocation6 + $0x148] sm:$0xff]
        %v1392 = vld [vmem:[#allocation6 + $0x150] sm:$0xff]
        %v1393 = vld [vmem:[#allocation6 + $0x158] sm:$0xff]
        %v1394 = vld [vmem:[#allocation6 + $0x160] sm:$0xff]
        %v1395 = vld [vmem:[#allocation6 + $0x168] sm:$0xff]
        %v1396 = vld [vmem:[#allocation6 + $0x170] sm:$0xff]
        %v1397 = vld [vmem:[#allocation6 + $0x178] sm:$0xff]
        %v1398 = vld [vmem:[#allocation6 + $0x180] sm:$0xff]
        %v1399 = vld [vmem:[#allocation6 + $0x188] sm:$0xff]
        %v1400 = vld [vmem:[#allocation6 + $0x190] sm:$0xff]
        %v1401 = vld [vmem:[#allocation6 + $0x198] sm:$0xff]
        %v1402 = vld [vmem:[#allocation6 + $0x1a0] sm:$0xff]
        %v1403 = vld [vmem:[#allocation6 + $0x1a8] sm:$0xff]
        %v1404 = vld [vmem:[#allocation6 + $0x1b0] sm:$0xff]
        %v1405 = vld [vmem:[#allocation6 + $0x1b8] sm:$0xff]
        %v1406 = vld [vmem:[#allocation6 + $0x1c0] sm:$0xff]
        %v1407 = vld [vmem:[#allocation6 + $0x1c8] sm:$0xff]
        %v1408 = vld [vmem:[#allocation6 + $0x1d0] sm:$0xff]
        %v1409 = vld [vmem:[#allocation6 + $0x1d8] sm:$0xff]
        %v1410 = vld [vmem:[#allocation6 + $0x1e0] sm:$0xff]
        %v1411 = vld [vmem:[#allocation6 + $0x1e8] sm:$0xff]
        %v1412 = vld [vmem:[#allocation6 + $0x1f0] sm:$0xff]
        %v1413 = vld [vmem:[#allocation6 + $0x1f8] sm:$0xff]
        %1414 = vmatprep.subr.mxu0 %v1351
        %1415 = vmatpush1.msra.mxu0 %v1350
        %1416 = vmatprep.subr.mxu0 %v1355
        %1417 = vmatpush1.msra.mxu0 %v1354
        %1418 = vmatprep.subr.mxu0 %v1359
        %1419 = vmatpush1.msra.mxu0 %v1358
        %1420 = vmatprep.subr.mxu0 %v1363
        %1421 = vmatpush1.msra.mxu0 %v1362
        %1422 = vmatprep.subr.mxu0 %v1367
        %1423 = vmatpush1.msra.mxu0 %v1366
        %1424 = vmatprep.subr.mxu0 %v1371
        %1425 = vmatpush1.msra.mxu0 %v1370
        %1426 = vmatprep.subr.mxu0 %v1375
        %1427 = vmatpush1.msra.mxu0 %v1374
        %1428 = vmatprep.subr.mxu0 %v1379
        %1429 = vmatpush1.msra.mxu0 %v1378
        %1430 = vmatprep.subr.mxu0 %v1383
        %1431 = vmatpush1.msra.mxu0 %v1382
        %1432 = vmatprep.subr.mxu0 %v1387
        %1433 = vmatpush1.msra.mxu0 %v1386
        %1434 = vmatprep.subr.mxu0 %v1391
        %1435 = vmatpush1.msra.mxu0 %v1390
        %1436 = vmatprep.subr.mxu0 %v1395
        %1437 = vmatpush1.msra.mxu0 %v1394
        %1438 = vmatprep.subr.mxu0 %v1399
        %1439 = vmatpush1.msra.mxu0 %v1398
        %1440 = vmatprep.subr.mxu0 %v1403
        %1441 = vmatpush1.msra.mxu0 %v1402
        %1442 = vmatprep.subr.mxu0 %v1407
        %1443 = vmatpush1.msra.mxu0 %v1406
        %1444 = vmatprep.subr.mxu0 %v1411
        %1445 = vmatpush1.msra.mxu0 %v1410
        %1446 = vmatprep.subr.mxu0 0.0
        %1447 = vmatpush1.msra.mxu0 0.0
        %1448 = vmatprep.subr.mxu0 0.0
        %1449 = vmatpush1.msra.mxu0 0.0
        %1450 = vmatprep.subr.mxu0 0.0
        %1451 = vmatpush1.msra.mxu0 0.0
        %1452 = vmatprep.subr.mxu0 0.0
        %1453 = vmatpush1.msra.mxu0 0.0
        %1454 = vmatprep.subr.mxu0 0.0
        %1455 = vmatpush1.msra.mxu0 0.0
        %1456 = vmatprep.subr.mxu0 0.0
        %1457 = vmatpush1.msra.mxu0 0.0
        %1458 = vmatprep.subr.mxu0 0.0
        %1459 = vmatpush1.msra.mxu0 0.0
        %1460 = vmatprep.subr.mxu0 0.0
        %1461 = vmatpush1.msra.mxu0 0.0
        %1462 = vmatprep.subr.mxu0 0.0
        %1463 = vmatpush1.msra.mxu0 0.0
        %1464 = vmatprep.subr.mxu0 0.0
        %1465 = vmatpush1.msra.mxu0 0.0
        %1466 = vmatprep.subr.mxu0 0.0
        %1467 = vmatpush1.msra.mxu0 0.0
        %1468 = vmatprep.subr.mxu0 0.0
        %1469 = vmatpush1.msra.mxu0 0.0
        %1470 = vmatprep.subr.mxu0 0.0
        %1471 = vmatpush1.msra.mxu0 0.0
        %1472 = vmatprep.subr.mxu0 0.0
        %1473 = vmatpush1.msra.mxu0 0.0
        %1474 = vmatprep.subr.mxu0 0.0
        %1475 = vmatpush1.msra.mxu0 0.0
        %1476 = vmatprep.subr.mxu0 0.0
        %1477 = vmatpush1.msra.mxu0 0.0
        %1478 = vmatprep.mubr.f32.mxu0 0.0
        %1479 = vmatmul.mubr.f32.gmra.mrb[0].mxu0 %v1343
        %v1480 = vpop.f32.mrb[0].mxu0
        %v1481 = vadd.f32 0.0, %v1480
        %v1482 = vpop.f32.mrb[0].mxu0
        %v1483 = vadd.f32 0.0, %v1482
        %1484 = vdwg.mxu0
        %1485 = vmatprep.subr.mxu0 %v1353
        %1486 = vmatpush1.msra.mxu0 %v1352
        %1487 = vmatprep.subr.mxu0 %v1357
        %1488 = vmatpush1.msra.mxu0 %v1356
        %1489 = vmatprep.subr.mxu0 %v1361
        %1490 = vmatpush1.msra.mxu0 %v1360
        %1491 = vmatprep.subr.mxu0 %v1365
        %1492 = vmatpush1.msra.mxu0 %v1364
        %1493 = vmatprep.subr.mxu0 %v1369
        %1494 = vmatpush1.msra.mxu0 %v1368
        %1495 = vmatprep.subr.mxu0 %v1373
        %1496 = vmatpush1.msra.mxu0 %v1372
        %1497 = vmatprep.subr.mxu0 %v1377
        %1498 = vmatpush1.msra.mxu0 %v1376
        %1499 = vmatprep.subr.mxu0 %v1381
        %1500 = vmatpush1.msra.mxu0 %v1380
        %1501 = vmatprep.subr.mxu0 %v1385
        %1502 = vmatpush1.msra.mxu0 %v1384
        %1503 = vmatprep.subr.mxu0 %v1389
        %1504 = vmatpush1.msra.mxu0 %v1388
        %1505 = vmatprep.subr.mxu0 %v1393
        %1506 = vmatpush1.msra.mxu0 %v1392
        %1507 = vmatprep.subr.mxu0 %v1397
        %1508 = vmatpush1.msra.mxu0 %v1396
        %1509 = vmatprep.subr.mxu0 %v1401
        %1510 = vmatpush1.msra.mxu0 %v1400
        %1511 = vmatprep.subr.mxu0 %v1405
        %1512 = vmatpush1.msra.mxu0 %v1404
        %1513 = vmatprep.subr.mxu0 %v1409
        %1514 = vmatpush1.msra.mxu0 %v1408
        %1515 = vmatprep.subr.mxu0 %v1413
        %1516 = vmatpush1.msra.mxu0 %v1412
        %1517 = vmatprep.subr.mxu0 0.0
        %1518 = vmatpush1.msra.mxu0 0.0
        %1519 = vmatprep.subr.mxu0 0.0
        %1520 = vmatpush1.msra.mxu0 0.0
        %1521 = vmatprep.subr.mxu0 0.0
        %1522 = vmatpush1.msra.mxu0 0.0
        %1523 = vmatprep.subr.mxu0 0.0
        %1524 = vmatpush1.msra.mxu0 0.0
        %1525 = vmatprep.subr.mxu0 0.0
        %1526 = vmatpush1.msra.mxu0 0.0
        %1527 = vmatprep.subr.mxu0 0.0
        %1528 = vmatpush1.msra.mxu0 0.0
        %1529 = vmatprep.subr.mxu0 0.0
        %1530 = vmatpush1.msra.mxu0 0.0
        %1531 = vmatprep.subr.mxu0 0.0
        %1532 = vmatpush1.msra.mxu0 0.0
        %1533 = vmatprep.subr.mxu0 0.0
        %1534 = vmatpush1.msra.mxu0 0.0
        %1535 = vmatprep.subr.mxu0 0.0
        %1536 = vmatpush1.msra.mxu0 0.0
        %1537 = vmatprep.subr.mxu0 0.0
        %1538 = vmatpush1.msra.mxu0 0.0
        %1539 = vmatprep.subr.mxu0 0.0
        %1540 = vmatpush1.msra.mxu0 0.0
        %1541 = vmatprep.subr.mxu0 0.0
        %1542 = vmatpush1.msra.mxu0 0.0
        %1543 = vmatprep.subr.mxu0 0.0
        %1544 = vmatpush1.msra.mxu0 0.0
        %1545 = vmatprep.subr.mxu0 0.0
        %1546 = vmatpush1.msra.mxu0 0.0
        %1547 = vmatprep.subr.mxu0 0.0
        %1548 = vmatpush1.msra.mxu0 0.0
        %1549 = vmatprep.mubr.f32.mxu0 0.0
        %1550 = vmatmul.mubr.f32.gmra.mrb[0].mxu0 %v1343
        %v1551 = vpop.f32.mrb[0].mxu0
        %v1552 = vadd.f32 0.0, %v1551
        %v1553 = vpop.f32.mrb[0].mxu0
        %v1554 = vadd.f32 0.0, %v1553
        %1555 = vdwg.mxu0
        %v1556 = vadd.f32 %v1346, %v1481
        %v1557 = vadd.f32 %v1347, %v1483
        %v1558 = vadd.f32 %v1348, %v1552
        %v1559 = vadd.f32 %v1349, %v1554
        %v1560 = vmul.f32 %v1556, 0.5
        %v1561 = vtanh.pop %v1560
        %v1562 = vadd.f32 %v1561, 1.0
        %v1563 = vmul.f32 %v1562, 0.5
        %v1564 = vmul.f32 %v1557, 0.5
        %v1565 = vtanh.pop %v1564
        %v1566 = vadd.f32 %v1565, 1.0
        %v1567 = vmul.f32 %v1566, 0.5
        %v1568 = vtanh.pop %v1558
        %v1569 = vmul.f32 %v1559, 0.5
        %v1570 = vtanh.pop %v1569
        %v1571 = vadd.f32 %v1570, 1.0
        %v1572 = vmul.f32 %v1571, 0.5
        %v1573 = vmul.f32 %v1567, %v1344
        %v1574 = vmul.f32 %v1563, %v1568
        %v1575 = vadd.f32 %v1573, %v1574
        %v1576 = vtanh.pop %v1575
        %v1577 = vmul.f32 %v1572, %v1576
        %1578 = vst [vmem:[#allocation2] sm:$0xff] %v1577
        %1579 = vst [vmem:[#allocation3] sm:$0xff] %v1575
        %s1580 = scalar_lea.vmem %s355, 24 [#allocation9]
        %1581 = vst [vmem:[%s1580] sm:$0xff] %v1577
        %s1582 = sand.u32 %s186, 1
        %s1583 = scalar_lea.sflag [#allocation8], %s1582
        %s1584 = sand.u32 %s186, 1
        %s1585 = smul.addr %s1584, 32
        %s1586 = scalar_lea.vmem [#allocation9], %s1585
        // Predicated region
        $region91: #{tpu_custom_call.1} parent=77 // pred_check
          %p1587 = pneg %p196
        $region92: #{tpu_custom_call.1} parent=77 // pred_check_branch
          %1589 = sbr.rel (%p1587) target = $region94
        $region93: #{tpu_custom_call.1} parent=77 // pred_region
          %s1590 = smul.u32 4, %s26
          %s1592 = ssub.s32 512, 512
          %1593 = vsyncadd %s1583, %s1592
          %s1594 = smul.addr %s1590, 2
          %s1595 = sadd.s32 %s25, %s1594
          %s1596 = smul.addr %s1595, 128
          %s1597 = scalar_lea.hbm %s6, %s1596
          %s1598 = sshll.u32 %s1586, 4
          %s1599 = int_to_ptr.vmem [resolvable:$true] %s1598
          %1604 = dma.vmem_to_hbm [thread:$0]  %s1599, 512, %s1597, %s1583, 128, 256, 8
        $region94: #{tpu_custom_call.1} parent=77 // pred_fallthru
          _
      $region78: #{tpu_custom_call.1} parent=5 // pred_fallthru
        _
      %p1605 = scmp.le.s32.totalorder 2, %s16
      // Predicated region
      $region95: #{tpu_custom_call.1} parent=5 // pred_check
        %p1606 = pneg %p1605
      $region96: #{tpu_custom_call.1} parent=5 // pred_check_branch
        %1608 = sbr.rel (%p1606) target = $region98
      $region97: #{tpu_custom_call.1} parent=5 // pred_region
        %s1609 = ssub.s32 %s16, 2
        // Predicated region
        $region99: #{tpu_custom_call.1} parent=97 // pred_check
          %p1610 = pneg %p202
        $region100: #{tpu_custom_call.1} parent=97 // pred_check_branch
          %1612 = sbr.rel (%p1610) target = $region102
        $region101: #{tpu_custom_call.1} parent=97 // pred_region
          %s1613 = sand.u32 %s187, 1
          %s1614 = scalar_lea.sflag [#allocation8], %s1613
          %s1615 = sand.u32 %s187, 1
          %s1616 = smul.addr %s1615, 32
          %s1617 = scalar_lea.vmem [#allocation9], %s1616
          %1618 = dma.done %s1614, 512
        $region102: #{tpu_custom_call.1} parent=97 // pred_fallthru
          _
      $region98: #{tpu_custom_call.1} parent=5 // pred_fallthru
        _
    $region6: #{tpu_custom_call.1} parent=1 // loop_footer
      %s20 = sadd.s32 1, %s16
    $region7: #{tpu_custom_call.1} parent=1 // loop_footer_branch
      %15 = sbr.rel target = $region3
    $region8: #{tpu_custom_call.1} parent=1 // loop_exit
      _
    %1619 = vsyncpa [#allocation7], 1
    %s1620 = scalar_lea.sflag [#allocation7], 1
    %1621 = vsyncpa %s1620, 1
    %1622 = vsyncpa [#allocation8], 1
    %s1623 = scalar_lea.sflag [#allocation8], 1
    %1624 = vsyncpa %s1623, 1

</llo_original>
